<compile_context>
chip_gen: v7x
topology: tpu7x:2x2x1
jax: 0.10.0
libtpu: 0.0.40
codegen_flags: <defaults>
</compile_context>

<pallas_src>
import functools

import jax
import jax.numpy as jnp
from jax import lax
from jax.experimental import pallas as pl
from jax.experimental.pallas import tpu as pltpu


NEWTON_SCHULZ_ITERS = 5            # SqrtmLayer(cov_mat, 5)
_TILE_TARGET_BYTES = 2 * 1024 * 1024


def _round_up(a, b):
    return -(-a // b) * b


def _choose_tiles(m, c, target_bytes=_TILE_TARGET_BYTES):
    """Lane tile (multiple of 128, ~target_bytes of f32 per (C, Mt) block) + padded M."""
    max_lanes = max(128, (target_bytes // (4 * c)) // 128 * 128)
    tile = min(max_lanes, _round_up(m, 128))
    m_pad = _round_up(m, tile)
    return m_pad, tile, m_pad // tile


def _center_crop(x):
    """Mirror the 200x200 center-crop branches of SOCA.forward (static shapes)."""
    _, _, h, w = x.shape
    h1, w1 = 200, 200
    if h < h1 and w < w1:
        return x
    elif h < h1 and w > w1:
        woff = (w - w1) // 2
        return x[:, :, :, woff:woff + w1]
    elif w < w1 and h > h1:
        hoff = (h - h1) // 2
        return x[:, :, hoff:hoff + h1, :]
    else:
        hoff = (h - h1) // 2
        woff = (w - w1) // 2
        return x[:, :, hoff:hoff + h1, woff:woff + w1]


def _soca_gate_kernel(x_ref, w1t_ref, b1_ref, w2_ref, b2_ref, eye_ref,
                      gate_ref, cov_acc, sum_acc, *, true_m):
    # x_ref block: (1, C, Mt); w1t: (C, Cr); b1: (1, Cr); w2: (C, Cr); b2: (C, 1)
    t = pl.program_id(1)
    last_t = pl.num_programs(1) - 1
    inv_m = 1.0 / true_m

    @pl.when(t == 0)
    def _init():
        cov_acc[...] = jnp.zeros_like(cov_acc)
        sum_acc[...] = jnp.zeros_like(sum_acc)

    x = x_ref[0]                                         # (C, Mt) f32 (zero-padded past M)
    xb = x.astype(jnp.bfloat16)                          # bf16 operands into the MXU
    cov_acc[...] += lax.dot_general(                     # += X_t @ X_t^T  (f32 accumulate)
        xb, xb, (((1,), (1,)), ((), ())),
        preferred_element_type=jnp.float32)
    sum_acc[...] += jnp.sum(x, axis=1, keepdims=True)    # (C, 1) per-channel row sums

    @pl.when(t == last_t)
    def _finalize():
        s = sum_acc[...]                                 # (C, 1)
        outer = s * jnp.transpose(s)                     # (C, C) == s s^T  (tiny)
        # cov = (1/M) Xc Xc^T == (S - s s^T / M) / M   (true M, padding is exact)
        cov = (cov_acc[...] - outer * inv_m) * inv_m

        eye = eye_ref[...]
        eye3 = 3.0 * eye
        # trace(cov); like the PyTorch original this is unguarded (all-zero crop -> NaN).
        norm_a = jnp.sum(jnp.sum(cov * eye, axis=1, keepdims=True),
                         axis=0, keepdims=True)          # (1, 1)
        a_mat = cov * pl.reciprocal(norm_a, approx=True)

        # ---- MPNCOV.SqrtmLayer (Newton-Schulz, iterN = 5) ----
        zy = 0.5 * (eye3 - a_mat)
        y_mat = jnp.dot(a_mat, zy, preferred_element_type=jnp.float32)
        z_mat = zy
        for _ in range(1, NEWTON_SCHULZ_ITERS - 1):      # i = 1 .. iterN-2
            zy = 0.5 * (eye3 - jnp.dot(z_mat, y_mat, preferred_element_type=jnp.float32))
            y_new = jnp.dot(y_mat, zy, preferred_element_type=jnp.float32)
            z_mat = jnp.dot(zy, z_mat, preferred_element_type=jnp.float32)
            y_mat = y_new
        zy = 0.5 * jnp.dot(
            y_mat, eye3 - jnp.dot(z_mat, y_mat, preferred_element_type=jnp.float32),
            preferred_element_type=jnp.float32)
        cov_sqrt = zy * jnp.sqrt(norm_a)                 # (C, C)

        # torch.mean(cov_mat_sqrt, 1): cov_sqrt is symmetric up to fp rounding,
        # so the lane-axis mean keeps channels on sublanes (no transpose needed).
        v = jnp.mean(cov_sqrt, axis=1, keepdims=True)    # (C, 1)

        # conv_du: 1x1 convs as broadcast+reduce (no tiny matmuls, no transposes)
        h1 = jnp.sum(w1t_ref[...] * v, axis=0, keepdims=True) + b1_ref[...]   # (1, Cr)
        h1 = jnp.maximum(h1, 0.0)
        y = jnp.sum(w2_ref[...] * h1, axis=1, keepdims=True) + b2_ref[...]    # (C, 1)
        gate_ref[0] = jax.nn.sigmoid(y)


def _soca_rescale_kernel(gate_ref, x_ref, o_ref):
    # gate block: (1, C, 1); x/o block: (1, C, Mt)
    o_ref[0] = x_ref[0] * gate_ref[0]


def soca_pallas(x, w1, b1, w2, b2):
    """x: (B, C, H, W) f32 NCHW; w1: (Cr, C); b1: (Cr,); w2: (C, Cr); b2: (C,)."""
    B, C, H, W = x.shape
    Cr = w1.shape[0]
    x = x.astype(jnp.float32)

    # ---- pass 1: per-(batch, channel) gate from the center-cropped region ----
    x_sub = _center_crop(x)
    Mc = x_sub.shape[2] * x_sub.shape[3]
    mp1, mt1, t1 = _choose_tiles(Mc, C)
    xc = x_sub.reshape(B, C, Mc)
    if mp1 > Mc:
        xc = jnp.pad(xc, ((0, 0), (0, 0), (0, mp1 - Mc)))

    w1t = jnp.transpose(w1).astype(jnp.float32)          # (C, Cr)
    b1r = b1.reshape(1, Cr).astype(jnp.float32)
    w2f = w2.astype(jnp.float32)                         # (C, Cr)
    b2c = b2.reshape(C, 1).astype(jnp.float32)
    eye = jnp.eye(C, dtype=jnp.float32)

    gate = pl.pallas_call(
        functools.partial(_soca_gate_kernel, true_m=float(Mc)),
        out_shape=jax.ShapeDtypeStruct((B, C, 1), jnp.float32),
        grid_spec=pltpu.PrefetchScalarGridSpec(
            num_scalar_prefetch=0,
            grid=(B, t1),
            in_specs=[
                pl.BlockSpec((1, C, mt1), lambda b, t: (b, 0, t)),
                pl.BlockSpec((C, Cr), lambda b, t: (0, 0)),
                pl.BlockSpec((1, Cr), lambda b, t: (0, 0)),
                pl.BlockSpec((C, Cr), lambda b, t: (0, 0)),
                pl.BlockSpec((C, 1), lambda b, t: (0, 0)),
                pl.BlockSpec((C, C), lambda b, t: (0, 0)),
            ],
            out_specs=pl.BlockSpec((1, C, 1), lambda b, t: (b, 0, 0)),
            scratch_shapes=[pltpu.VMEM((C, C), jnp.float32),
                            pltpu.VMEM((C, 1), jnp.float32)],
        ),
        compiler_params=pltpu.CompilerParams(
            dimension_semantics=("parallel", "arbitrary")),
    )(xc, w1t, b1r, w2f, b2c, eye)

    # ---- pass 2: rescale the FULL x by the gate (y_cov * x) ----
    Mf = H * W
    mp2, mt2, t2 = _choose_tiles(Mf, C)
    xf = x.reshape(B, C, Mf)
    if mp2 > Mf:
        xf = jnp.pad(xf, ((0, 0), (0, 0), (0, mp2 - Mf)))

    out = pl.pallas_call(
        _soca_rescale_kernel,
        out_shape=jax.ShapeDtypeStruct((B, C, mp2), jnp.float32),
        grid_spec=pltpu.PrefetchScalarGridSpec(
            num_scalar_prefetch=0,
            grid=(B, t2),
            in_specs=[
                pl.BlockSpec((1, C, 1), lambda b, t: (b, 0, 0)),
                pl.BlockSpec((1, C, mt2), lambda b, t: (b, 0, t)),
            ],
            out_specs=pl.BlockSpec((1, C, mt2), lambda b, t: (b, 0, t)),
        ),
        compiler_params=pltpu.CompilerParams(
            dimension_semantics=("parallel", "parallel")),
    )(gate, xf)

    return out[:, :, :Mf].reshape(B, C, H, W)


def soca_reference(x, w1, b1, w2, b2):
    """Pure-JAX f32 reference mirroring the PyTorch / MPNCOV code exactly."""
    x = x.astype(jnp.float32)
    x_sub = _center_crop(x)
    B, C = x.shape[0], x.shape[1]
    M = x_sub.shape[2] * x_sub.shape[3]
    xf = x_sub.reshape(B, C, M)
    i_hat = (-1.0 / M / M) * jnp.ones((M, M), jnp.float32) \
        + (1.0 / M) * jnp.eye(M, dtype=jnp.float32)
    cov = jnp.einsum('bcm,mn,bdn->bcd', xf, i_hat, xf)

    eye = jnp.eye(C, dtype=jnp.float32)
    eye3 = 3.0 * eye
    norm_a = jnp.trace(cov, axis1=1, axis2=2)
    a = cov / norm_a[:, None, None]
    zy = 0.5 * (eye3 - a)
    y = a @ zy
    z = zy
    for _ in range(1, NEWTON_SCHULZ_ITERS - 1):
        zy = 0.5 * (eye3 - z @ y)
        y, z = y @ zy, zy @ z
    zy = 0.5 * (y @ (eye3 - z @ y))
    cov_sqrt = zy * jnp.sqrt(norm_a)[:, None, None]

    v = jnp.mean(cov_sqrt, axis=1)                        # torch.mean(cov_mat_sqrt, 1)
    h = jnp.maximum(v @ w1.T + b1, 0.0)
    yg = jax.nn.sigmoid(h @ w2.T + b2)
    return yg[:, :, None, None] * x                       # rescale the FULL x


if __name__ == "__main__":
    B, C, H, W = 2, 16, 8, 8
    reduction = 8
    Cr = C // reduction

    key = jax.random.PRNGKey(0)
    kx, k1, k2, k3, k4 = jax.random.split(key, 5)
    x = jax.random.normal(kx, (B, C, H, W), jnp.float32)

    # Deterministic parameter init (Conv2d 1x1 weights collapsed to dense):
    w1 = 0.1 * jax.random.normal(k1, (Cr, C), jnp.float32)    # conv1: C -> C//r
    b1 = 0.05 * jax.random.normal(k2, (Cr,), jnp.float32)
    w2 = 0.1 * jax.random.normal(k3, (C, Cr), jnp.float32)    # conv2: C//r -> C
    b2 = 0.05 * jax.random.normal(k4, (C,), jnp.float32)

    out = soca_pallas(x, w1, b1, w2, b2)
    out = jax.block_until_ready(out)

    ref = soca_reference(x, w1, b1, w2, b2)
    assert out.shape == (B, C, H, W)
    err = float(jnp.max(jnp.abs(out - ref)))
    # Tolerance covers the bf16 MXU operands used for the covariance accumulation.
    assert err < 1e-2, f"max abs err {err}"

    print("KERNEL_OK")
</pallas_src>

<mosaic_0001>
module attributes {stable_mosaic.version = 11 : i64} {
  func.func @_soca_gate_kernel(%arg0: i32, %arg1: i32, %arg2: memref<1x16x128xf32, #tpu.memory_space<vmem>>, %arg3: memref<16x2xf32, #tpu.memory_space<vmem>>, %arg4: memref<1x2xf32, #tpu.memory_space<vmem>>, %arg5: memref<16x2xf32, #tpu.memory_space<vmem>>, %arg6: memref<16x1xf32, #tpu.memory_space<vmem>>, %arg7: memref<16x16xf32, #tpu.memory_space<vmem>>, %arg8: memref<1x16x1xf32, #tpu.memory_space<vmem>>, %arg9: memref<16x16xf32, #tpu.memory_space<vmem>>, %arg10: memref<16x1xf32, #tpu.memory_space<vmem>>) attributes {dimension_semantics = [#tpu.dimension_semantics<parallel>, #tpu.dimension_semantics<arbitrary>], iteration_bounds = array<i64: 2, 1>, scalar_prefetch = 0 : i64, scratch_operands = 2 : i64, tpu.core_type = #tpu.core_type<tc>, window_params = [{transform_indices = @transform_0, window_bounds = array<i64: 1, 16, 128>}, {pipeline_mode = #tpu.pipeline_mode<synchronous>, transform_indices = @transform_1, window_bounds = array<i64: 16, 2>}, {pipeline_mode = #tpu.pipeline_mode<synchronous>, transform_indices = @transform_2, window_bounds = array<i64: 1, 2>}, {pipeline_mode = #tpu.pipeline_mode<synchronous>, transform_indices = @transform_3, window_bounds = array<i64: 16, 2>}, {pipeline_mode = #tpu.pipeline_mode<synchronous>, transform_indices = @transform_4, window_bounds = array<i64: 16, 1>}, {pipeline_mode = #tpu.pipeline_mode<synchronous>, transform_indices = @transform_5, window_bounds = array<i64: 16, 16>}, {transform_indices = @transform_6, window_bounds = array<i64: 1, 16, 1>}]} {
    %c0_i32 = arith.constant 0 : i32
    %0 = arith.cmpi eq, %arg1, %c0_i32 : i32
    %1 = arith.extui %0 : i1 to i32
    %c0_i32_0 = arith.constant 0 : i32
    %2 = arith.cmpi ne, %1, %c0_i32_0 : i32
    scf.if %2 {
      %cst_14 = arith.constant 0.000000e+00 : f32
      %18 = vector.broadcast %cst_14 : f32 to vector<16x16xf32>
      %c0_15 = arith.constant 0 : index
      %c0_16 = arith.constant 0 : index
      %19 = vector.load %arg9[%c0_15, %c0_16] : memref<16x16xf32, #tpu.memory_space<vmem>>, vector<16x16xf32>
      tpu.vector_store %arg9[%c0_15, %c0_16], %18 {strides = array<i32>} : memref<16x16xf32, #tpu.memory_space<vmem>>, vector<16x16xf32>,
      %cst_17 = arith.constant 0.000000e+00 : f32
      %20 = vector.broadcast %cst_17 : f32 to vector<16x1xf32>
      %c0_18 = arith.constant 0 : index
      %c0_19 = arith.constant 0 : index
      %21 = vector.load %arg10[%c0_18, %c0_19] : memref<16x1xf32, #tpu.memory_space<vmem>>, vector<16x1xf32>
      tpu.vector_store %arg10[%c0_18, %c0_19], %20 {strides = array<i32>} : memref<16x1xf32, #tpu.memory_space<vmem>>, vector<16x1xf32>,
    } else {
    }
    %c0 = arith.constant 0 : index
    %c0_1 = arith.constant 0 : index
    %c0_2 = arith.constant 0 : index
    %3 = vector.load %arg2[%c0, %c0_1, %c0_2] : memref<1x16x128xf32, #tpu.memory_space<vmem>>, vector<1x16x128xf32>
    %4 = vector.shape_cast %3 : vector<1x16x128xf32> to vector<16x128xf32>
    %5 = arith.truncf %4 : vector<16x128xf32> to vector<16x128xbf16>
    %c0_3 = arith.constant 0 : index
    %c0_4 = arith.constant 0 : index
    %6 = vector.load %arg9[%c0_3, %c0_4] : memref<16x16xf32, #tpu.memory_space<vmem>>, vector<16x16xf32>
    %cst = arith.constant dense<0.000000e+00> : vector<16x16xf32>
    %7 = tpu.matmul %5, %5, %cst {dimension_numbers = #tpu.dot_dimension_numbers<[1], [1], [0], [0], [0, 0, 1, 0], [], []>} : vector<16x128xbf16>, vector<16x128xbf16>, vector<16x16xf32> -> vector<16x16xf32>
    %8 = arith.addf %6, %7 : vector<16x16xf32>
    %c0_5 = arith.constant 0 : index
    %c0_6 = arith.constant 0 : index
    %9 = vector.load %arg9[%c0_5, %c0_6] : memref<16x16xf32, #tpu.memory_space<vmem>>, vector<16x16xf32>
    tpu.vector_store %arg9[%c0_5, %c0_6], %8 {strides = array<i32>} : memref<16x16xf32, #tpu.memory_space<vmem>>, vector<16x16xf32>,
    %c0_7 = arith.constant 0 : index
    %c0_8 = arith.constant 0 : index
    %10 = vector.load %arg10[%c0_7, %c0_8] : memref<16x1xf32, #tpu.memory_space<vmem>>, vector<16x1xf32>
    %cst_9 = arith.constant dense<0.000000e+00> : vector<16xf32>
    %11 = vector.multi_reduction <add>, %4, %cst_9 [1] : vector<16x128xf32> to vector<16xf32>
    %12 = vector.shape_cast %11 : vector<16xf32> to vector<16x1xf32>
    %13 = arith.addf %10, %12 : vector<16x1xf32>
    %c0_10 = arith.constant 0 : index
    %c0_11 = arith.constant 0 : index
    %14 = vector.load %arg10[%c0_10, %c0_11] : memref<16x1xf32, #tpu.memory_space<vmem>>, vector<16x1xf32>
    tpu.vector_store %arg10[%c0_10, %c0_11], %13 {strides = array<i32>} : memref<16x1xf32, #tpu.memory_space<vmem>>, vector<16x1xf32>,
    %c0_i32_12 = arith.constant 0 : i32
    %15 = arith.cmpi eq, %arg1, %c0_i32_12 : i32
    %16 = arith.extui %15 : i1 to i32
    %c0_i32_13 = arith.constant 0 : i32
    %17 = arith.cmpi ne, %16, %c0_i32_13 : i32
    scf.if %17 {
      %c0_14 = arith.constant 0 : index
      %c0_15 = arith.constant 0 : index
      %18 = vector.load %arg10[%c0_14, %c0_15] : memref<16x1xf32, #tpu.memory_space<vmem>>, vector<16x1xf32>
      %19 = tpu.transpose %18, [1, 0] : vector<16x1xf32> -> vector<1x16xf32>
      %20 = vector.broadcast %18 : vector<16x1xf32> to vector<16x16xf32>
      %21 = vector.broadcast %19 : vector<1x16xf32> to vector<16x16xf32>
      %22 = arith.mulf %20, %21 : vector<16x16xf32>
      %c0_16 = arith.constant 0 : index
      %c0_17 = arith.constant 0 : index
      %23 = vector.load %arg9[%c0_16, %c0_17] : memref<16x16xf32, #tpu.memory_space<vmem>>, vector<16x16xf32>
      %cst_18 = arith.constant 1.562500e-02 : f32
      %24 = vector.broadcast %cst_18 : f32 to vector<16x16xf32>
      %25 = arith.mulf %22, %24 : vector<16x16xf32>
      %26 = arith.subf %23, %25 : vector<16x16xf32>
      %cst_19 = arith.constant 1.562500e-02 : f32
      %27 = vector.broadcast %cst_19 : f32 to vector<16x16xf32>
      %28 = arith.mulf %26, %27 : vector<16x16xf32>
      %c0_20 = arith.constant 0 : index
      %c0_21 = arith.constant 0 : index
      %29 = vector.load %arg7[%c0_20, %c0_21] : memref<16x16xf32, #tpu.memory_space<vmem>>, vector<16x16xf32>
      %cst_22 = arith.constant 3.000000e+00 : f32
      %30 = vector.broadcast %cst_22 : f32 to vector<16x16xf32>
      %31 = arith.mulf %30, %29 : vector<16x16xf32>
      %32 = arith.mulf %28, %29 : vector<16x16xf32>
      %cst_23 = arith.constant dense<0.000000e+00> : vector<16xf32>
      %33 = vector.multi_reduction <add>, %32, %cst_23 [1] : vector<16x16xf32> to vector<16xf32>
      %34 = vector.shape_cast %33 : vector<16xf32> to vector<16x1xf32>
      %cst_24 = arith.constant dense<0.000000e+00> : vector<1xf32>
      %35 = vector.multi_reduction <add>, %34, %cst_24 [0] : vector<16x1xf32> to vector<1xf32>
      %36 = vector.shape_cast %35 : vector<1xf32> to vector<1x1xf32>
      %37 = tpu.reciprocal %36 {approx = true} : vector<1x1xf32> -> vector<1x1xf32>
      %38 = vector.broadcast %37 : vector<1x1xf32> to vector<16x16xf32>
      %39 = arith.mulf %28, %38 : vector<16x16xf32>
      %40 = arith.subf %31, %39 : vector<16x16xf32>
      %cst_25 = arith.constant 5.000000e-01 : f32
      %41 = vector.broadcast %cst_25 : f32 to vector<16x16xf32>
      %42 = arith.mulf %41, %40 : vector<16x16xf32>
      %cst_26 = arith.constant dense<0.000000e+00> : vector<16x16xf32>
      %43 = tpu.matmul %39, %42, %cst_26 {dimension_numbers = #tpu.dot_dimension_numbers<[1], [0], [0], [1], [0, 0, 1, 1], [], []>} : vector<16x16xf32>, vector<16x16xf32>, vector<16x16xf32> -> vector<16x16xf32>
      %cst_27 = arith.constant dense<0.000000e+00> : vector<16x16xf32>
      %44 = tpu.matmul %42, %43, %cst_27 {dimension_numbers = #tpu.dot_dimension_numbers<[1], [0], [0], [1], [0, 0, 1, 1], [], []>} : vector<16x16xf32>, vector<16x16xf32>, vector<16x16xf32> -> vector<16x16xf32>
      %45 = arith.subf %31, %44 : vector<16x16xf32>
      %cst_28 = arith.constant 5.000000e-01 : f32
      %46 = vector.broadcast %cst_28 : f32 to vector<16x16xf32>
      %47 = arith.mulf %46, %45 : vector<16x16xf32>
      %cst_29 = arith.constant dense<0.000000e+00> : vector<16x16xf32>
      %48 = tpu.matmul %43, %47, %cst_29 {dimension_numbers = #tpu.dot_dimension_numbers<[1], [0], [0], [1], [0, 0, 1, 1], [], []>} : vector<16x16xf32>, vector<16x16xf32>, vector<16x16xf32> -> vector<16x16xf32>
      %cst_30 = arith.constant dense<0.000000e+00> : vector<16x16xf32>
      %49 = tpu.matmul %47, %42, %cst_30 {dimension_numbers = #tpu.dot_dimension_numbers<[1], [0], [0], [1], [0, 0, 1, 1], [], []>} : vector<16x16xf32>, vector<16x16xf32>, vector<16x16xf32> -> vector<16x16xf32>
      %cst_31 = arith.constant dense<0.000000e+00> : vector<16x16xf32>
      %50 = tpu.matmul %49, %48, %cst_31 {dimension_numbers = #tpu.dot_dimension_numbers<[1], [0], [0], [1], [0, 0, 1, 1], [], []>} : vector<16x16xf32>, vector<16x16xf32>, vector<16x16xf32> -> vector<16x16xf32>
      %51 = arith.subf %31, %50 : vector<16x16xf32>
      %cst_32 = arith.constant 5.000000e-01 : f32
      %52 = vector.broadcast %cst_32 : f32 to vector<16x16xf32>
      %53 = arith.mulf %52, %51 : vector<16x16xf32>
      %cst_33 = arith.constant dense<0.000000e+00> : vector<16x16xf32>
      %54 = tpu.matmul %48, %53, %cst_33 {dimension_numbers = #tpu.dot_dimension_numbers<[1], [0], [0], [1], [0, 0, 1, 1], [], []>} : vector<16x16xf32>, vector<16x16xf32>, vector<16x16xf32> -> vector<16x16xf32>
      %cst_34 = arith.constant dense<0.000000e+00> : vector<16x16xf32>
      %55 = tpu.matmul %53, %49, %cst_34 {dimension_numbers = #tpu.dot_dimension_numbers<[1], [0], [0], [1], [0, 0, 1, 1], [], []>} : vector<16x16xf32>, vector<16x16xf32>, vector<16x16xf32> -> vector<16x16xf32>
      %cst_35 = arith.constant dense<0.000000e+00> : vector<16x16xf32>
      %56 = tpu.matmul %55, %54, %cst_35 {dimension_numbers = #tpu.dot_dimension_numbers<[1], [0], [0], [1], [0, 0, 1, 1], [], []>} : vector<16x16xf32>, vector<16x16xf32>, vector<16x16xf32> -> vector<16x16xf32>
      %57 = arith.subf %31, %56 : vector<16x16xf32>
      %cst_36 = arith.constant 5.000000e-01 : f32
      %58 = vector.broadcast %cst_36 : f32 to vector<16x16xf32>
      %59 = arith.mulf %58, %57 : vector<16x16xf32>
      %cst_37 = arith.constant dense<0.000000e+00> : vector<16x16xf32>
      %60 = tpu.matmul %54, %59, %cst_37 {dimension_numbers = #tpu.dot_dimension_numbers<[1], [0], [0], [1], [0, 0, 1, 1], [], []>} : vector<16x16xf32>, vector<16x16xf32>, vector<16x16xf32> -> vector<16x16xf32>
      %cst_38 = arith.constant dense<0.000000e+00> : vector<16x16xf32>
      %61 = tpu.matmul %59, %55, %cst_38 {dimension_numbers = #tpu.dot_dimension_numbers<[1], [0], [0], [1], [0, 0, 1, 1], [], []>} : vector<16x16xf32>, vector<16x16xf32>, vector<16x16xf32> -> vector<16x16xf32>
      %cst_39 = arith.constant dense<0.000000e+00> : vector<16x16xf32>
      %62 = tpu.matmul %61, %60, %cst_39 {dimension_numbers = #tpu.dot_dimension_numbers<[1], [0], [0], [1], [0, 0, 1, 1], [], []>} : vector<16x16xf32>, vector<16x16xf32>, vector<16x16xf32> -> vector<16x16xf32>
      %63 = arith.subf %31, %62 : vector<16x16xf32>
      %cst_40 = arith.constant dense<0.000000e+00> : vector<16x16xf32>
      %64 = tpu.matmul %60, %63, %cst_40 {dimension_numbers = #tpu.dot_dimension_numbers<[1], [0], [0], [1], [0, 0, 1, 1], [], []>} : vector<16x16xf32>, vector<16x16xf32>, vector<16x16xf32> -> vector<16x16xf32>
      %cst_41 = arith.constant 5.000000e-01 : f32
      %65 = vector.broadcast %cst_41 : f32 to vector<16x16xf32>
      %66 = arith.mulf %65, %64 : vector<16x16xf32>
      %67 = math.sqrt %36 : vector<1x1xf32>
      %68 = vector.broadcast %67 : vector<1x1xf32> to vector<16x16xf32>
      %69 = arith.mulf %66, %68 : vector<16x16xf32>
      %cst_42 = arith.constant dense<0.000000e+00> : vector<16xf32>
      %70 = vector.multi_reduction <add>, %69, %cst_42 [1] : vector<16x16xf32> to vector<16xf32>
      %71 = vector.shape_cast %70 : vector<16xf32> to vector<16x1xf32>
      %cst_43 = arith.constant 1.600000e+01 : f32
      %72 = vector.broadcast %cst_43 : f32 to vector<16x1xf32>
      %73 = arith.divf %71, %72 : vector<16x1xf32>
      %c0_44 = arith.constant 0 : index
      %c0_45 = arith.constant 0 : index
      %74 = vector.load %arg3[%c0_44, %c0_45] : memref<16x2xf32, #tpu.memory_space<vmem>>, vector<16x2xf32>
      %75 = vector.broadcast %73 : vector<16x1xf32> to vector<16x2xf32>
      %76 = arith.mulf %74, %75 : vector<16x2xf32>
      %cst_46 = arith.constant dense<0.000000e+00> : vector<2xf32>
      %77 = vector.multi_reduction <add>, %76, %cst_46 [0] : vector<16x2xf32> to vector<2xf32>
      %78 = vector.shape_cast %77 : vector<2xf32> to vector<1x2xf32>
      %c0_47 = arith.constant 0 : index
      %c0_48 = arith.constant 0 : index
      %79 = vector.load %arg4[%c0_47, %c0_48] : memref<1x2xf32, #tpu.memory_space<vmem>>, vector<1x2xf32>
      %80 = arith.addf %78, %79 : vector<1x2xf32>
      %cst_49 = arith.constant 0.000000e+00 : f32
      %81 = vector.broadcast %cst_49 : f32 to vector<1x2xf32>
      %82 = arith.maximumf %80, %81 : vector<1x2xf32>
      %c0_50 = arith.constant 0 : index
      %c0_51 = arith.constant 0 : index
      %83 = vector.load %arg5[%c0_50, %c0_51] : memref<16x2xf32, #tpu.memory_space<vmem>>, vector<16x2xf32>
      %84 = vector.broadcast %82 : vector<1x2xf32> to vector<16x2xf32>
      %85 = arith.mulf %83, %84 : vector<16x2xf32>
      %cst_52 = arith.constant dense<0.000000e+00> : vector<16xf32>
      %86 = vector.multi_reduction <add>, %85, %cst_52 [1] : vector<16x2xf32> to vector<16xf32>
      %87 = vector.shape_cast %86 : vector<16xf32> to vector<16x1xf32>
      %c0_53 = arith.constant 0 : index
      %c0_54 = arith.constant 0 : index
      %88 = vector.load %arg6[%c0_53, %c0_54] : memref<16x1xf32, #tpu.memory_space<vmem>>, vector<16x1xf32>
      %89 = arith.addf %87, %88 : vector<16x1xf32>
      %90 = arith.negf %89 : vector<16x1xf32>
      %91 = math.exp %90 : vector<16x1xf32>
      %cst_55 = arith.constant 1.000000e+00 : f32
      %92 = vector.broadcast %cst_55 : f32 to vector<16x1xf32>
      %93 = arith.addf %92, %91 : vector<16x1xf32>
      %94 = arith.divf %92, %93 : vector<16x1xf32>
      %c0_56 = arith.constant 0 : index
      %c0_57 = arith.constant 0 : index
      %c0_58 = arith.constant 0 : index
      %95 = vector.load %arg8[%c0_56, %c0_57, %c0_58] : memref<1x16x1xf32, #tpu.memory_space<vmem>>, vector<1x16x1xf32>
      %96 = vector.shape_cast %95 : vector<1x16x1xf32> to vector<16x1xf32>
      %97 = vector.shape_cast %94 : vector<16x1xf32> to vector<1x16x1xf32>
      tpu.vector_store %arg8[%c0_56, %c0_57, %c0_58], %97 {strides = array<i32>} : memref<1x16x1xf32, #tpu.memory_space<vmem>>, vector<1x16x1xf32>,
    } else {
    }
    return
  }
  func.func @transform_0(%arg0: i32, %arg1: i32) -> (i32, i32, i32) {
    %c0_i32 = arith.constant 0 : i32
    %c0_i32_0 = arith.constant 0 : i32
    return %arg0, %c0_i32, %arg1 : i32, i32, i32
  }
  func.func @transform_1(%arg0: i32, %arg1: i32) -> (i32, i32) {
    %c0_i32 = arith.constant 0 : i32
    %c0_i32_0 = arith.constant 0 : i32
    %c0_i32_1 = arith.constant 0 : i32
    return %c0_i32, %c0_i32_0 : i32, i32
  }
  func.func @transform_2(%arg0: i32, %arg1: i32) -> (i32, i32) {
    %c0_i32 = arith.constant 0 : i32
    %c0_i32_0 = arith.constant 0 : i32
    %c0_i32_1 = arith.constant 0 : i32
    return %c0_i32, %c0_i32_0 : i32, i32
  }
  func.func @transform_3(%arg0: i32, %arg1: i32) -> (i32, i32) {
    %c0_i32 = arith.constant 0 : i32
    %c0_i32_0 = arith.constant 0 : i32
    %c0_i32_1 = arith.constant 0 : i32
    return %c0_i32, %c0_i32_0 : i32, i32
  }
  func.func @transform_4(%arg0: i32, %arg1: i32) -> (i32, i32) {
    %c0_i32 = arith.constant 0 : i32
    %c0_i32_0 = arith.constant 0 : i32
    %c0_i32_1 = arith.constant 0 : i32
    return %c0_i32, %c0_i32_0 : i32, i32
  }
  func.func @transform_5(%arg0: i32, %arg1: i32) -> (i32, i32) {
    %c0_i32 = arith.constant 0 : i32
    %c0_i32_0 = arith.constant 0 : i32
    %c0_i32_1 = arith.constant 0 : i32
    return %c0_i32, %c0_i32_0 : i32, i32
  }
  func.func @transform_6(%arg0: i32, %arg1: i32) -> (i32, i32, i32) {
    %c0_i32 = arith.constant 0 : i32
    %c0_i32_0 = arith.constant 0 : i32
    %c0_i32_1 = arith.constant 0 : i32
    return %arg0, %c0_i32, %c0_i32_0 : i32, i32, i32
  }
}

</mosaic_0001>

<llo_original>
// kernel: tpu_custom_call.1
$region0: #{tpu_custom_call.1}
  #allocation0 [shape = 'u32[]', space=smem, size = 0x4, offset = 0x4, fixed_abs, tag = 'smem constant byte address 0x4 - core index']
  #allocation1 [shape = 'u32[144,128]{1,0:T(1,128)}', space=vmem, size = 0x12000, scoped, tag = 'internal scratch']
  #allocation2 [shape = 'f32[16,16]{1,0:T(8,128)}', space=vmem, size = 0x2000, scoped, tag = 'scratch operand']
  #allocation3 [shape = 'f32[16,1]{1,0:T(8,128)}', space=vmem, size = 0x2000, scoped, tag = 'scratch operand']
  %s0 = inlined_call_operand.vmem [shape: f32[2,16,128], index: 0, kind: input, shape index: {}]
  %s1 = inlined_call_operand.vmem [shape: f32[16,2], index: 1, kind: input, shape index: {}]
  %s2 = inlined_call_operand.vmem [shape: f32[1,2], index: 2, kind: input, shape index: {}]
  %s3 = inlined_call_operand.vmem [shape: f32[16,2], index: 3, kind: input, shape index: {}]
  %s4 = inlined_call_operand.vmem [shape: f32[16,1], index: 4, kind: input, shape index: {}]
  %s5 = inlined_call_operand.vmem [shape: f32[16,16], index: 5, kind: input, shape index: {}]
  %s6 = inlined_call_operand.vmem [shape: f32[2,16,1], index: 6, kind: output, shape index: {}]
  %s7 = sld [smem:[#allocation0]]
  $region65: #{tpu_custom_call.1} parent=0
    _
  %s9 = ssub.s32 1, %s7
  %s10 = scalar_select 0, %s9, %s7
  loop: start=0, step=1, limit=4
  $region2: #{tpu_custom_call.1} parent=0 // loop_pre_header
    _
  $region3: #{tpu_custom_call.1} parent=0 // loop_header
    %s12 = sphi 0, %s16
    %p13 = scmp.ge.s32.totalorder %s12, 4
    %s19 = sphi 0, %s31
    %s20 = sphi 0, %s27
    %s21 = sphi 0, %s19
    %s22 = sphi 0, %s20
    %s23 = sphi 0, %s21
    %s24 = sphi 0, %s22
    %s36 = sphi 0, %s38
    %s39 = sphi 0, %s36
    %s40 = sphi 0, %s39
    %s56 = sphi 0, %s40
    %s60 = sphi 0, %s60
    %s62 = sphi 0, %s60
    %s63 = sphi 0, %s62
    %s77 = sphi 0, %s63
    %s81 = sphi 0, %s81
    %s83 = sphi 0, %s81
    %s84 = sphi 0, %s83
    %s98 = sphi 0, %s84
    %s102 = sphi 0, %s102
    %s104 = sphi 0, %s102
    %s105 = sphi 0, %s104
    %s119 = sphi 0, %s105
    %s123 = sphi 0, %s123
    %s125 = sphi 0, %s123
    %s126 = sphi 0, %s125
    %s140 = sphi 0, %s126
    %s144 = sphi 0, %s144
    %s146 = sphi 0, %s144
    %s147 = sphi 0, %s146
    %s161 = sphi 0, %s147
    %s167 = sphi 0, %s169
    %s170 = sphi 0, %s167
    %s171 = sphi 0, %s170
    %s187 = sphi 0, %s171
  $region4: #{tpu_custom_call.1} parent=0 // loop_header_branch
    %15 = sbr.rel (%p13) target = $region8
  $region5: #{tpu_custom_call.1} parent=0 // loop_body
    %s17 = ssub.s32 %s12, 1
    %s18 = ssub.s32 %s12, 2
    %s25 = sadd.s32 1, %s20
    %p26 = scmp.ge.s32.totalorder %s25, 1
    %s27 = scalar_select %p26, 0, %s25
    %s28 = sadd.s32 1, %s19
    %s29 = scalar_select %p26, %s28, %s19
    %p30 = scmp.ge.s32.totalorder %s29, 2
    %s31 = scalar_select %p30, 0, %s29
    %s32 = ssub.s32 %s19, %s31
    %s33 = ssub.s32 %s20, %s27
    %s34 = sor.u32 %s32, %s33
    %p35 = scmp.eq.s32.totalorder %s34, 0
    %s37 = sadd.s32 %s36, 1
    %s38 = scalar_select %p35, %s36, %s37
    %p41 = pneg %p35
    %p42 = scmp.eq.s32.totalorder %s12, 1
    %p43 = por %p41, %p42
    %p44 = scmp.ne.s32.totalorder %s36, %s39
    %p45 = scmp.eq.s32.totalorder %s12, 0
    %p46 = por %p44, %p45
    %p47 = scmp.ne.s32.totalorder %s36, %s39
    %p48 = scmp.eq.s32.totalorder %s17, 1
    %p49 = por %p47, %p48
    %p50 = scmp.ne.s32.totalorder %s39, %s40
    %p51 = scmp.eq.s32.totalorder %s17, 0
    %p52 = por %p50, %p51
    %p53 = scmp.ne.s32.totalorder %s39, %s40
    %p54 = scmp.eq.s32.totalorder %s18, 1
    %p55 = por %p53, %p54
    %p57 = scmp.ne.s32.totalorder %s40, %s56
    %p58 = scmp.eq.s32.totalorder %s18, 0
    %p59 = por %p57, %p58
    %s61 = sadd.s32 %s60, 1
    %p64 = scmp.eq.s32.totalorder %s12, 1
    %p65 = scmp.ne.s32.totalorder %s60, %s62
    %p66 = scmp.eq.s32.totalorder %s12, 0
    %p67 = por %p65, %p66
    %p68 = scmp.ne.s32.totalorder %s60, %s62
    %p69 = scmp.eq.s32.totalorder %s17, 1
    %p70 = por %p68, %p69
    %p71 = scmp.ne.s32.totalorder %s62, %s63
    %p72 = scmp.eq.s32.totalorder %s17, 0
    %p73 = por %p71, %p72
    %p74 = scmp.ne.s32.totalorder %s62, %s63
    %p75 = scmp.eq.s32.totalorder %s18, 1
    %p76 = por %p74, %p75
    %p78 = scmp.ne.s32.totalorder %s63, %s77
    %p79 = scmp.eq.s32.totalorder %s18, 0
    %p80 = por %p78, %p79
    %s82 = sadd.s32 %s81, 1
    %p85 = scmp.eq.s32.totalorder %s12, 1
    %p86 = scmp.ne.s32.totalorder %s81, %s83
    %p87 = scmp.eq.s32.totalorder %s12, 0
    %p88 = por %p86, %p87
    %p89 = scmp.ne.s32.totalorder %s81, %s83
    %p90 = scmp.eq.s32.totalorder %s17, 1
    %p91 = por %p89, %p90
    %p92 = scmp.ne.s32.totalorder %s83, %s84
    %p93 = scmp.eq.s32.totalorder %s17, 0
    %p94 = por %p92, %p93
    %p95 = scmp.ne.s32.totalorder %s83, %s84
    %p96 = scmp.eq.s32.totalorder %s18, 1
    %p97 = por %p95, %p96
    %p99 = scmp.ne.s32.totalorder %s84, %s98
    %p100 = scmp.eq.s32.totalorder %s18, 0
    %p101 = por %p99, %p100
    %s103 = sadd.s32 %s102, 1
    %p106 = scmp.eq.s32.totalorder %s12, 1
    %p107 = scmp.ne.s32.totalorder %s102, %s104
    %p108 = scmp.eq.s32.totalorder %s12, 0
    %p109 = por %p107, %p108
    %p110 = scmp.ne.s32.totalorder %s102, %s104
    %p111 = scmp.eq.s32.totalorder %s17, 1
    %p112 = por %p110, %p111
    %p113 = scmp.ne.s32.totalorder %s104, %s105
    %p114 = scmp.eq.s32.totalorder %s17, 0
    %p115 = por %p113, %p114
    %p116 = scmp.ne.s32.totalorder %s104, %s105
    %p117 = scmp.eq.s32.totalorder %s18, 1
    %p118 = por %p116, %p117
    %p120 = scmp.ne.s32.totalorder %s105, %s119
    %p121 = scmp.eq.s32.totalorder %s18, 0
    %p122 = por %p120, %p121
    %s124 = sadd.s32 %s123, 1
    %p127 = scmp.eq.s32.totalorder %s12, 1
    %p128 = scmp.ne.s32.totalorder %s123, %s125
    %p129 = scmp.eq.s32.totalorder %s12, 0
    %p130 = por %p128, %p129
    %p131 = scmp.ne.s32.totalorder %s123, %s125
    %p132 = scmp.eq.s32.totalorder %s17, 1
    %p133 = por %p131, %p132
    %p134 = scmp.ne.s32.totalorder %s125, %s126
    %p135 = scmp.eq.s32.totalorder %s17, 0
    %p136 = por %p134, %p135
    %p137 = scmp.ne.s32.totalorder %s125, %s126
    %p138 = scmp.eq.s32.totalorder %s18, 1
    %p139 = por %p137, %p138
    %p141 = scmp.ne.s32.totalorder %s126, %s140
    %p142 = scmp.eq.s32.totalorder %s18, 0
    %p143 = por %p141, %p142
    %s145 = sadd.s32 %s144, 1
    %p148 = scmp.eq.s32.totalorder %s12, 1
    %p149 = scmp.ne.s32.totalorder %s144, %s146
    %p150 = scmp.eq.s32.totalorder %s12, 0
    %p151 = por %p149, %p150
    %p152 = scmp.ne.s32.totalorder %s144, %s146
    %p153 = scmp.eq.s32.totalorder %s17, 1
    %p154 = por %p152, %p153
    %p155 = scmp.ne.s32.totalorder %s146, %s147
    %p156 = scmp.eq.s32.totalorder %s17, 0
    %p157 = por %p155, %p156
    %p158 = scmp.ne.s32.totalorder %s146, %s147
    %p159 = scmp.eq.s32.totalorder %s18, 1
    %p160 = por %p158, %p159
    %p162 = scmp.ne.s32.totalorder %s147, %s161
    %p163 = scmp.eq.s32.totalorder %s18, 0
    %p164 = por %p162, %p163
    %s165 = ssub.s32 %s19, %s31
    %p166 = scmp.eq.s32.totalorder %s165, 0
    %s168 = sadd.s32 %s167, 1
    %s169 = scalar_select %p166, %s167, %s168
    %p172 = pneg %p166
    %p173 = scmp.eq.s32.totalorder %s12, 1
    %p174 = por %p172, %p173
    %p175 = scmp.ne.s32.totalorder %s167, %s170
    %p176 = scmp.eq.s32.totalorder %s12, 0
    %p177 = por %p175, %p176
    %p178 = scmp.ne.s32.totalorder %s167, %s170
    %p179 = scmp.eq.s32.totalorder %s17, 1
    %p180 = por %p178, %p179
    %p181 = scmp.ne.s32.totalorder %s170, %s171
    %p182 = scmp.eq.s32.totalorder %s17, 0
    %p183 = por %p181, %p182
    %p184 = scmp.ne.s32.totalorder %s170, %s171
    %p185 = scmp.eq.s32.totalorder %s18, 1
    %p186 = por %p184, %p185
    %p188 = scmp.ne.s32.totalorder %s171, %s187
    %p189 = scmp.eq.s32.totalorder %s18, 0
    %p190 = por %p188, %p189
    %p191 = scmp.le.s32.totalorder 1, %s12
    %p192 = scmp.lt.s32.totalorder %s12, 3
    %p193 = pnand %p191, %p192
    %p194 = pneg %p193
    // Predicated region
    $region9: #{tpu_custom_call.1} parent=5 // pred_check
      _
    $region10: #{tpu_custom_call.1} parent=5 // pred_check_branch
      %196 = sbr.rel (%p193) target = $region12
    $region11: #{tpu_custom_call.1} parent=5 // pred_region
      %s197 = ssub.s32 %s12, 1
      // Predicated region
      $region13: #{tpu_custom_call.1} parent=11 // pred_check
        %p198 = pneg %p73
      $region14: #{tpu_custom_call.1} parent=11 // pred_check_branch
        %200 = sbr.rel (%p198) target = $region16
      $region15: #{tpu_custom_call.1} parent=11 // pred_region
        _
      $region16: #{tpu_custom_call.1} parent=11 // pred_fallthru
        _
      // Predicated region
      $region17: #{tpu_custom_call.1} parent=11 // pred_check
        %p201 = pneg %p94
      $region18: #{tpu_custom_call.1} parent=11 // pred_check_branch
        %203 = sbr.rel (%p201) target = $region20
      $region19: #{tpu_custom_call.1} parent=11 // pred_region
        _
      $region20: #{tpu_custom_call.1} parent=11 // pred_fallthru
        _
      // Predicated region
      $region21: #{tpu_custom_call.1} parent=11 // pred_check
        %p204 = pneg %p115
      $region22: #{tpu_custom_call.1} parent=11 // pred_check_branch
        %206 = sbr.rel (%p204) target = $region24
      $region23: #{tpu_custom_call.1} parent=11 // pred_region
        _
      $region24: #{tpu_custom_call.1} parent=11 // pred_fallthru
        _
      // Predicated region
      $region25: #{tpu_custom_call.1} parent=11 // pred_check
        %p207 = pneg %p136
      $region26: #{tpu_custom_call.1} parent=11 // pred_check_branch
        %209 = sbr.rel (%p207) target = $region28
      $region27: #{tpu_custom_call.1} parent=11 // pred_region
        _
      $region28: #{tpu_custom_call.1} parent=11 // pred_fallthru
        _
      // Predicated region
      $region29: #{tpu_custom_call.1} parent=11 // pred_check
        %p210 = pneg %p157
      $region30: #{tpu_custom_call.1} parent=11 // pred_check_branch
        %212 = sbr.rel (%p210) target = $region32
      $region31: #{tpu_custom_call.1} parent=11 // pred_region
        _
      $region32: #{tpu_custom_call.1} parent=11 // pred_fallthru
        _
    $region12: #{tpu_custom_call.1} parent=5 // pred_fallthru
      _
    %p213 = scmp.lt.s32.totalorder %s12, 2
    // Predicated region
    $region33: #{tpu_custom_call.1} parent=5 // pred_check
      %p214 = pneg %p213
    $region34: #{tpu_custom_call.1} parent=5 // pred_check_branch
      %216 = sbr.rel (%p214) target = $region36
    $region35: #{tpu_custom_call.1} parent=5 // pred_region
      // Predicated region
      $region37: #{tpu_custom_call.1} parent=35 // pred_check
        %p217 = pneg %p46
      $region38: #{tpu_custom_call.1} parent=35 // pred_check_branch
        %219 = sbr.rel (%p217) target = $region40
      $region39: #{tpu_custom_call.1} parent=35 // pred_region
        %p220 = scmp.lt.s32.totalorder %s19, 1
        %s221 = scalar_select %p220, %s19, 1
        %p222 = scmp.lt.s32.totalorder %s20, 0
        %s223 = scalar_select %p222, %s20, 0
        %s224 = smul.addr %s221, 2
        %s225 = sadd.s32 %s223, %s224
        %s226 = smul.addr %s225, 8
        %s227 = scalar_lea.vmem %s0, %s226
      $region40: #{tpu_custom_call.1} parent=35 // pred_fallthru
        _
    $region36: #{tpu_custom_call.1} parent=5 // pred_fallthru
      _
    %p228 = scmp.le.s32.totalorder 1, %s12
    %p229 = scmp.lt.s32.totalorder %s12, 3
    %p230 = pnand %p228, %p229
    %p231 = pneg %p230
    // Predicated region
    $region41: #{tpu_custom_call.1} parent=5 // pred_check
      _
    $region42: #{tpu_custom_call.1} parent=5 // pred_check_branch
      %233 = sbr.rel (%p230) target = $region44
    $region43: #{tpu_custom_call.1} parent=5 // pred_region
      %s234 = ssub.s32 %s12, 1
      %p235 = scmp.lt.s32.totalorder %s21, 1
      %s236 = scalar_select %p235, %s21, 1
      %p237 = scmp.lt.s32.totalorder %s22, 0
      %s238 = scalar_select %p237, %s22, 0
      %s239 = smul.addr %s236, 2
      %s240 = sadd.s32 %s238, %s239
      %s241 = smul.addr %s240, 8
      %s242 = scalar_lea.vmem %s0, %s241
      %p243 = pneg %p52
      %p244 = pneg %p49
      %p245 = pneg %p73
      %p246 = pneg %p70
      %p247 = pneg %p94
      %p248 = pneg %p91
      %p249 = pneg %p115
      %p250 = pneg %p112
      %p251 = pneg %p136
      %p252 = pneg %p133
      %p253 = pneg %p157
      %p254 = pneg %p154
      %p255 = pneg %p183
      %p256 = pneg %p180
      %p257 = scmp.lt.s32.totalorder %s21, 1
      %s258 = scalar_select %p257, %s21, 1
      %s259 = smul.addr %s258, 2
      %s260 = smul.addr %s259, 8
      %s261 = scalar_lea.vmem %s6, %s260
      %p262 = scmp.lt.s32.totalorder %s21, 1
      %s263 = scalar_select %p262, %s21, 1
      %p264 = scmp.lt.s32.totalorder %s22, 0
      %s265 = scalar_select %p264, %s22, 0
      %s266 = smul.addr %s263, 2
      %s267 = sadd.s32 %s265, %s266
      %s268 = smul.addr %s267, 8
      %s269 = scalar_lea.vmem %s0, %s268
      %p270 = scmp.lt.s32.totalorder %s21, 1
      %s271 = scalar_select %p270, %s21, 1
      %s272 = smul.addr %s271, 2
      %s273 = smul.addr %s272, 8
      %s274 = scalar_lea.vmem %s6, %s273
      %p276 = scmp.eq.s32.totalorder %s22, 0
      // Predicated region
      $region45: #{tpu_custom_call.1} parent=43 // pred_check
        %p277 = pneg %p276
      $region46: #{tpu_custom_call.1} parent=43 // pred_check_branch
        %279 = sbr.rel (%p277) target = $region48
      $region47: #{tpu_custom_call.1} parent=43 // pred_region
        %vm280 = vcmask 130048
        %281 = vst.msk [vmem:[#allocation2] sm:$0xff] %vm280, 0.0
        %282 = vst.msk [vmem:[#allocation2 + $0x8] sm:$0xff] %vm280, 0.0
        %vm283 = vcmask 7168
        %284 = vst.msk [vmem:[#allocation3] sm:$0xff] %vm283, 0.0
        %285 = vst.msk [vmem:[#allocation3 + $0x8] sm:$0xff] %vm283, 0.0
      $region48: #{tpu_custom_call.1} parent=43 // pred_fallthru
        _
      %v286 = vld [vmem:[%s269] sm:$0xff]
      %v287 = vld [vmem:[%s269 + $0x8] sm:$0xff]
      %v288 = vpack.c.bf16 %v287, %v286
      %v289 = vld [vmem:[#allocation2] sm:$0xff]
      %v290 = vld [vmem:[#allocation2 + $0x8] sm:$0xff]
      %291 = vmatprep.subr.bf16.mxu0 0
      %292 = vmatpush1.bf16.xpose.msra.mxu0 %v288
      %293 = vmatprep.subr.bf16.mxu0 0
      %294 = vmatpush1.bf16.xpose.msra.mxu0 0
      %295 = vmatprep.subr.bf16.mxu0 0
      %296 = vmatpush1.bf16.xpose.msra.mxu0 0
      %297 = vmatprep.subr.bf16.mxu0 0
      %298 = vmatpush1.bf16.xpose.msra.mxu0 0
      %299 = vmatprep.subr.bf16.mxu0 0
      %300 = vmatpush1.bf16.xpose.msra.mxu0 0
      %301 = vmatprep.subr.bf16.mxu0 0
      %302 = vmatpush1.bf16.xpose.msra.mxu0 0
      %303 = vmatprep.subr.bf16.mxu0 0
      %304 = vmatpush1.bf16.xpose.msra.mxu0 0
      %305 = vmatprep.subr.bf16.mxu0 0
      %306 = vmatpush1.bf16.xpose.msra.mxu0 0
      %307 = vmatprep.subr.bf16.mxu0 0
      %308 = vmatpush1.bf16.xpose.msra.mxu0 0
      %309 = vmatprep.subr.bf16.mxu0 0
      %310 = vmatpush1.bf16.xpose.msra.mxu0 0
      %311 = vmatprep.subr.bf16.mxu0 0
      %312 = vmatpush1.bf16.xpose.msra.mxu0 0
      %313 = vmatprep.subr.bf16.mxu0 0
      %314 = vmatpush1.bf16.xpose.msra.mxu0 0
      %315 = vmatprep.subr.bf16.mxu0 0
      %316 = vmatpush1.bf16.xpose.msra.mxu0 0
      %317 = vmatprep.subr.bf16.mxu0 0
      %318 = vmatpush1.bf16.xpose.msra.mxu0 0
      %319 = vmatprep.subr.bf16.mxu0 0
      %320 = vmatpush1.bf16.xpose.msra.mxu0 0
      %321 = vmatprep.subr.bf16.mxu0 0
      %322 = vmatpush1.bf16.xpose.msra.mxu0 0
      %323 = vmatprep.mubr.bf16.mxu0 0
      %324 = vmatmul.mubr.bf16.gmra.mrb[0].mxu0 %v288
      %v325 = vpop.f32.mrb[0].mxu0
      %v326 = vadd.f32 0.0, %v325
      %v327 = vpop.f32.mrb[0].mxu0
      %v328 = vpop.f32.mrb[0].mxu0
      %v329 = vadd.f32 0.0, %v328
      %v330 = vpop.f32.mrb[0].mxu0
      %331 = vdwg.mxu0
      %v332 = vadd.f32 %v289, %v326
      %v333 = vadd.f32 %v290, %v329
      %vm334 = vcmask 130048
      %335 = vst.msk [vmem:[#allocation2] sm:$0xff] %vm334, %v332
      %336 = vst.msk [vmem:[#allocation2 + $0x8] sm:$0xff] %vm334, %v333
      %v337 = vld [vmem:[#allocation3] sm:$0xff]
      %v338 = vld [vmem:[#allocation3 + $0x8] sm:$0xff]
      %339 = vadd.xlane.f32.xlu0 %v286
      %v340 = vpop.xlane.xlu0 %339
      %341 = vadd.xlane.f32.xlu0 %v287
      %v342 = vpop.xlane.xlu0 %341
      %v343 = vadd.f32 %v337, %v340
      %v344 = vadd.f32 %v338, %v342
      %vm345 = vcmask 7168
      %346 = vst.msk [vmem:[#allocation3] sm:$0xff] %vm345, %v343
      %347 = vst.msk [vmem:[#allocation3 + $0x8] sm:$0xff] %vm345, %v344
      // Predicated region
      $region49: #{tpu_custom_call.1} parent=43 // pred_check
        %p348 = pneg %p276
      $region50: #{tpu_custom_call.1} parent=43 // pred_check_branch
        %350 = sbr.rel (%p348) target = $region52
      $region51: #{tpu_custom_call.1} parent=43 // pred_region
        %v351 = vld [vmem:[#allocation3] sm:$0xff]
        %v352 = vld [vmem:[#allocation3 + $0x8] sm:$0xff]
        %353 = vxpose.xlu0.b32.start [1/16] %v351, 128
        %354 = vxpose.xlu0.b32.cont [2/16] %v352, 128
        %355 = vxpose.xlu0.b32.cont [3/16] 0.0, 128
        %356 = vxpose.xlu0.b32.cont [4/16] 0.0, 128
        %357 = vxpose.xlu0.b32.cont [5/16] 0.0, 128
        %358 = vxpose.xlu0.b32.cont [6/16] 0.0, 128
        %359 = vxpose.xlu0.b32.cont [7/16] 0.0, 128
        %360 = vxpose.xlu0.b32.cont [8/16] 0.0, 128
        %361 = vxpose.xlu0.b32.cont [9/16] 0.0, 128
        %362 = vxpose.xlu0.b32.cont [10/16] 0.0, 128
        %363 = vxpose.xlu0.b32.cont [11/16] 0.0, 128
        %364 = vxpose.xlu0.b32.cont [12/16] 0.0, 128
        %365 = vxpose.xlu0.b32.cont [13/16] 0.0, 128
        %366 = vxpose.xlu0.b32.cont [14/16] 0.0, 128
        %367 = vxpose.xlu0.b32.cont [15/16] 0.0, 128
        %368 = vxpose.xlu0.b32.end [16/16] 0.0, 128
        %v369 = vpop.trf.xlu0
        %v370 = vpop.trf.xlu0
        %v371 = vpop.trf.xlu0
        %v372 = vpop.trf.xlu0
        %v373 = vpop.trf.xlu0
        %v374 = vpop.trf.xlu0
        %v375 = vpop.trf.xlu0
        %v376 = vpop.trf.xlu0
        %v377 = vpop.trf.xlu0
        %v378 = vpop.trf.xlu0
        %v379 = vpop.trf.xlu0
        %v380 = vpop.trf.xlu0
        %v381 = vpop.trf.xlu0
        %v382 = vpop.trf.xlu0
        %v383 = vpop.trf.xlu0
        %v384 = vpop.trf.xlu0
        %386 = vset.pattern.permute.xlu0 0
        %387 = vperm.xlu0 %386, %v351
        %v388 = vpop.permute.xlu0 %387
        %391 = vset.pattern.permute.xlu0 0
        %392 = vperm.xlu0 %391, %v352
        %v393 = vpop.permute.xlu0 %392
        %v395 = vlaneseq
        %v396 = vshrl.u32 %v395, 7
        %v397 = vsub.s32 0, %v396
        %v398 = vrot.slane %v369, %v397
        %v399 = vmul.f32 %v388, %v398
        %v400 = vmul.f32 %v393, %v398
        %v401 = vld [vmem:[#allocation2] sm:$0xff]
        %v402 = vld [vmem:[#allocation2 + $0x8] sm:$0xff]
        %v403 = vmul.f32 %v399, 0.015625
        %v404 = vmul.f32 %v400, 0.015625
        %v405 = vsub.f32 %v401, %v403
        %v406 = vsub.f32 %v402, %v404
        %v407 = vmul.f32 %v405, 0.015625
        %v408 = vmul.f32 %v406, 0.015625
        %v409 = vld [vmem:[%s5] sm:$0xff]
        %v410 = vld [vmem:[%s5 + $0x8] sm:$0xff]
        %v411 = vmul.f32 %v409, 3.0
        %v412 = vmul.f32 %v410, 3.0
        %v413 = vmul.f32 %v407, %v409
        %v414 = vmul.f32 %v408, %v410
        %v415 = vsel %vm334, %v413, 0.0
        %416 = vadd.xlane.f32.xlu0 %v415
        %v417 = vpop.xlane.xlu0 %416
        %v418 = vsel %vm334, %v414, 0.0
        %419 = vadd.xlane.f32.xlu0 %v418
        %v420 = vpop.xlane.xlu0 %419
        %v421 = vadd.f32 %v417, %v420
        %v422 = vrot.slane %v421, 4
        %v423 = vadd.f32 %v421, %v422
        %v424 = vrot.slane %v423, 2
        %v425 = vadd.f32 %v423, %v424
        %v426 = vrot.slane %v425, 1
        %v427 = vadd.f32 %v425, %v426
        %v428 = vrcp.pop %v427
        %v429 = vmul.f32 %v407, %v428
        %v430 = vmul.f32 %v408, %v428
        %v431 = vsub.f32 %v411, %v429
        %v432 = vsub.f32 %v412, %v430
        %v433 = vmul.f32 %v431, 0.5
        %v434 = vmul.f32 %v432, 0.5
        %v436 = vsel %vm334, %v429, 0
        %v439 = vsel %vm334, %v430, 0
        %441 = vmatprep.subr.mxu0 0.0
        %442 = vmatpush1.msra.mxu0 %v433
        %443 = vmatprep.subr.mxu0 0.0
        %444 = vmatpush1.msra.mxu0 %v434
        %445 = vmatprep.subr.mxu0 0.0
        %446 = vmatpush1.msra.mxu0 0.0
        %447 = vmatprep.subr.mxu0 0.0
        %448 = vmatpush1.msra.mxu0 0.0
        %449 = vmatprep.subr.mxu0 0.0
        %450 = vmatpush1.msra.mxu0 0.0
        %451 = vmatprep.subr.mxu0 0.0
        %452 = vmatpush1.msra.mxu0 0.0
        %453 = vmatprep.subr.mxu0 0.0
        %454 = vmatpush1.msra.mxu0 0.0
        %455 = vmatprep.subr.mxu0 0.0
        %456 = vmatpush1.msra.mxu0 0.0
        %457 = vmatprep.subr.mxu0 0.0
        %458 = vmatpush1.msra.mxu0 0.0
        %459 = vmatprep.subr.mxu0 0.0
        %460 = vmatpush1.msra.mxu0 0.0
        %461 = vmatprep.subr.mxu0 0.0
        %462 = vmatpush1.msra.mxu0 0.0
        %463 = vmatprep.subr.mxu0 0.0
        %464 = vmatpush1.msra.mxu0 0.0
        %465 = vmatprep.subr.mxu0 0.0
        %466 = vmatpush1.msra.mxu0 0.0
        %467 = vmatprep.subr.mxu0 0.0
        %468 = vmatpush1.msra.mxu0 0.0
        %469 = vmatprep.subr.mxu0 0.0
        %470 = vmatpush1.msra.mxu0 0.0
        %471 = vmatprep.subr.mxu0 0.0
        %472 = vmatpush1.msra.mxu0 0.0
        %473 = vmatprep.subr.mxu0 0.0
        %474 = vmatpush1.msra.mxu0 0.0
        %475 = vmatprep.subr.mxu0 0.0
        %476 = vmatpush1.msra.mxu0 0.0
        %477 = vmatprep.subr.mxu0 0.0
        %478 = vmatpush1.msra.mxu0 0.0
        %479 = vmatprep.subr.mxu0 0.0
        %480 = vmatpush1.msra.mxu0 0.0
        %481 = vmatprep.subr.mxu0 0.0
        %482 = vmatpush1.msra.mxu0 0.0
        %483 = vmatprep.subr.mxu0 0.0
        %484 = vmatpush1.msra.mxu0 0.0
        %485 = vmatprep.subr.mxu0 0.0
        %486 = vmatpush1.msra.mxu0 0.0
        %487 = vmatprep.subr.mxu0 0.0
        %488 = vmatpush1.msra.mxu0 0.0
        %489 = vmatprep.subr.mxu0 0.0
        %490 = vmatpush1.msra.mxu0 0.0
        %491 = vmatprep.subr.mxu0 0.0
        %492 = vmatpush1.msra.mxu0 0.0
        %493 = vmatprep.subr.mxu0 0.0
        %494 = vmatpush1.msra.mxu0 0.0
        %495 = vmatprep.subr.mxu0 0.0
        %496 = vmatpush1.msra.mxu0 0.0
        %497 = vmatprep.subr.mxu0 0.0
        %498 = vmatpush1.msra.mxu0 0.0
        %499 = vmatprep.subr.mxu0 0.0
        %500 = vmatpush1.msra.mxu0 0.0
        %501 = vmatprep.subr.mxu0 0.0
        %502 = vmatpush1.msra.mxu0 0.0
        %503 = vmatprep.subr.mxu0 0.0
        %504 = vmatpush1.msra.mxu0 0.0
        %505 = vmatprep.mubr.f32.mxu0 0.0
        %506 = vmatmul.mubr.f32.gmra.mrb[0].mxu0 %v436
        %v507 = vpop.f32.mrb[0].mxu0
        %v508 = vadd.f32 0.0, %v507
        %v509 = vpop.f32.mrb[0].mxu0
        %510 = vmatprep.mubr.f32.mxu0 0.0
        %511 = vmatmul.mubr.f32.gmra.mrb[0].mxu0 %v439
        %v512 = vpop.f32.mrb[0].mxu0
        %v513 = vadd.f32 0.0, %v512
        %v514 = vpop.f32.mrb[0].mxu0
        %515 = vdwg.mxu0
        %v517 = vsel %vm334, %v433, 0
        %v520 = vsel %vm334, %v434, 0
        %522 = vmatprep.subr.mxu0 0.0
        %523 = vmatpush1.msra.mxu0 %v508
        %524 = vmatprep.subr.mxu0 0.0
        %525 = vmatpush1.msra.mxu0 %v513
        %526 = vmatprep.subr.mxu0 0.0
        %527 = vmatpush1.msra.mxu0 0.0
        %528 = vmatprep.subr.mxu0 0.0
        %529 = vmatpush1.msra.mxu0 0.0
        %530 = vmatprep.subr.mxu0 0.0
        %531 = vmatpush1.msra.mxu0 0.0
        %532 = vmatprep.subr.mxu0 0.0
        %533 = vmatpush1.msra.mxu0 0.0
        %534 = vmatprep.subr.mxu0 0.0
        %535 = vmatpush1.msra.mxu0 0.0
        %536 = vmatprep.subr.mxu0 0.0
        %537 = vmatpush1.msra.mxu0 0.0
        %538 = vmatprep.subr.mxu0 0.0
        %539 = vmatpush1.msra.mxu0 0.0
        %540 = vmatprep.subr.mxu0 0.0
        %541 = vmatpush1.msra.mxu0 0.0
        %542 = vmatprep.subr.mxu0 0.0
        %543 = vmatpush1.msra.mxu0 0.0
        %544 = vmatprep.subr.mxu0 0.0
        %545 = vmatpush1.msra.mxu0 0.0
        %546 = vmatprep.subr.mxu0 0.0
        %547 = vmatpush1.msra.mxu0 0.0
        %548 = vmatprep.subr.mxu0 0.0
        %549 = vmatpush1.msra.mxu0 0.0
        %550 = vmatprep.subr.mxu0 0.0
        %551 = vmatpush1.msra.mxu0 0.0
        %552 = vmatprep.subr.mxu0 0.0
        %553 = vmatpush1.msra.mxu0 0.0
        %554 = vmatprep.subr.mxu0 0.0
        %555 = vmatpush1.msra.mxu0 0.0
        %556 = vmatprep.subr.mxu0 0.0
        %557 = vmatpush1.msra.mxu0 0.0
        %558 = vmatprep.subr.mxu0 0.0
        %559 = vmatpush1.msra.mxu0 0.0
        %560 = vmatprep.subr.mxu0 0.0
        %561 = vmatpush1.msra.mxu0 0.0
        %562 = vmatprep.subr.mxu0 0.0
        %563 = vmatpush1.msra.mxu0 0.0
        %564 = vmatprep.subr.mxu0 0.0
        %565 = vmatpush1.msra.mxu0 0.0
        %566 = vmatprep.subr.mxu0 0.0
        %567 = vmatpush1.msra.mxu0 0.0
        %568 = vmatprep.subr.mxu0 0.0
        %569 = vmatpush1.msra.mxu0 0.0
        %570 = vmatprep.subr.mxu0 0.0
        %571 = vmatpush1.msra.mxu0 0.0
        %572 = vmatprep.subr.mxu0 0.0
        %573 = vmatpush1.msra.mxu0 0.0
        %574 = vmatprep.subr.mxu0 0.0
        %575 = vmatpush1.msra.mxu0 0.0
        %576 = vmatprep.subr.mxu0 0.0
        %577 = vmatpush1.msra.mxu0 0.0
        %578 = vmatprep.subr.mxu0 0.0
        %579 = vmatpush1.msra.mxu0 0.0
        %580 = vmatprep.subr.mxu0 0.0
        %581 = vmatpush1.msra.mxu0 0.0
        %582 = vmatprep.subr.mxu0 0.0
        %583 = vmatpush1.msra.mxu0 0.0
        %584 = vmatprep.subr.mxu0 0.0
        %585 = vmatpush1.msra.mxu0 0.0
        %586 = vmatprep.mubr.f32.mxu0 0.0
        %587 = vmatmul.mubr.f32.gmra.mrb[0].mxu0 %v517
        %v588 = vpop.f32.mrb[0].mxu0
        %v589 = vadd.f32 0.0, %v588
        %v590 = vpop.f32.mrb[0].mxu0
        %591 = vmatprep.mubr.f32.mxu0 0.0
        %592 = vmatmul.mubr.f32.gmra.mrb[0].mxu0 %v520
        %v593 = vpop.f32.mrb[0].mxu0
        %v594 = vadd.f32 0.0, %v593
        %v595 = vpop.f32.mrb[0].mxu0
        %596 = vdwg.mxu0
        %v597 = vsub.f32 %v411, %v589
        %v598 = vsub.f32 %v412, %v594
        %v599 = vmul.f32 %v597, 0.5
        %v600 = vmul.f32 %v598, 0.5
        %v602 = vsel %vm334, %v508, 0
        %v605 = vsel %vm334, %v513, 0
        %607 = vmatprep.subr.mxu0 0.0
        %608 = vmatpush1.msra.mxu0 %v599
        %609 = vmatprep.subr.mxu0 0.0
        %610 = vmatpush1.msra.mxu0 %v600
        %611 = vmatprep.subr.mxu0 0.0
        %612 = vmatpush1.msra.mxu0 0.0
        %613 = vmatprep.subr.mxu0 0.0
        %614 = vmatpush1.msra.mxu0 0.0
        %615 = vmatprep.subr.mxu0 0.0
        %616 = vmatpush1.msra.mxu0 0.0
        %617 = vmatprep.subr.mxu0 0.0
        %618 = vmatpush1.msra.mxu0 0.0
        %619 = vmatprep.subr.mxu0 0.0
        %620 = vmatpush1.msra.mxu0 0.0
        %621 = vmatprep.subr.mxu0 0.0
        %622 = vmatpush1.msra.mxu0 0.0
        %623 = vmatprep.subr.mxu0 0.0
        %624 = vmatpush1.msra.mxu0 0.0
        %625 = vmatprep.subr.mxu0 0.0
        %626 = vmatpush1.msra.mxu0 0.0
        %627 = vmatprep.subr.mxu0 0.0
        %628 = vmatpush1.msra.mxu0 0.0
        %629 = vmatprep.subr.mxu0 0.0
        %630 = vmatpush1.msra.mxu0 0.0
        %631 = vmatprep.subr.mxu0 0.0
        %632 = vmatpush1.msra.mxu0 0.0
        %633 = vmatprep.subr.mxu0 0.0
        %634 = vmatpush1.msra.mxu0 0.0
        %635 = vmatprep.subr.mxu0 0.0
        %636 = vmatpush1.msra.mxu0 0.0
        %637 = vmatprep.subr.mxu0 0.0
        %638 = vmatpush1.msra.mxu0 0.0
        %639 = vmatprep.subr.mxu0 0.0
        %640 = vmatpush1.msra.mxu0 0.0
        %641 = vmatprep.subr.mxu0 0.0
        %642 = vmatpush1.msra.mxu0 0.0
        %643 = vmatprep.subr.mxu0 0.0
        %644 = vmatpush1.msra.mxu0 0.0
        %645 = vmatprep.subr.mxu0 0.0
        %646 = vmatpush1.msra.mxu0 0.0
        %647 = vmatprep.subr.mxu0 0.0
        %648 = vmatpush1.msra.mxu0 0.0
        %649 = vmatprep.subr.mxu0 0.0
        %650 = vmatpush1.msra.mxu0 0.0
        %651 = vmatprep.subr.mxu0 0.0
        %652 = vmatpush1.msra.mxu0 0.0
        %653 = vmatprep.subr.mxu0 0.0
        %654 = vmatpush1.msra.mxu0 0.0
        %655 = vmatprep.subr.mxu0 0.0
        %656 = vmatpush1.msra.mxu0 0.0
        %657 = vmatprep.subr.mxu0 0.0
        %658 = vmatpush1.msra.mxu0 0.0
        %659 = vmatprep.subr.mxu0 0.0
        %660 = vmatpush1.msra.mxu0 0.0
        %661 = vmatprep.subr.mxu0 0.0
        %662 = vmatpush1.msra.mxu0 0.0
        %663 = vmatprep.subr.mxu0 0.0
        %664 = vmatpush1.msra.mxu0 0.0
        %665 = vmatprep.subr.mxu0 0.0
        %666 = vmatpush1.msra.mxu0 0.0
        %667 = vmatprep.subr.mxu0 0.0
        %668 = vmatpush1.msra.mxu0 0.0
        %669 = vmatprep.subr.mxu0 0.0
        %670 = vmatpush1.msra.mxu0 0.0
        %671 = vmatprep.mubr.f32.mxu0 0.0
        %672 = vmatmul.mubr.f32.gmra.mrb[0].mxu0 %v602
        %v673 = vpop.f32.mrb[0].mxu0
        %v674 = vadd.f32 0.0, %v673
        %v675 = vpop.f32.mrb[0].mxu0
        %676 = vmatprep.mubr.f32.mxu0 0.0
        %677 = vmatmul.mubr.f32.gmra.mrb[0].mxu0 %v605
        %v678 = vpop.f32.mrb[0].mxu0
        %v679 = vadd.f32 0.0, %v678
        %v680 = vpop.f32.mrb[0].mxu0
        %681 = vdwg.mxu0
        %v683 = vsel %vm334, %v599, 0
        %v686 = vsel %vm334, %v600, 0
        %688 = vmatprep.subr.mxu0 0.0
        %689 = vmatpush1.msra.mxu0 %v433
        %690 = vmatprep.subr.mxu0 0.0
        %691 = vmatpush1.msra.mxu0 %v434
        %692 = vmatprep.subr.mxu0 0.0
        %693 = vmatpush1.msra.mxu0 0.0
        %694 = vmatprep.subr.mxu0 0.0
        %695 = vmatpush1.msra.mxu0 0.0
        %696 = vmatprep.subr.mxu0 0.0
        %697 = vmatpush1.msra.mxu0 0.0
        %698 = vmatprep.subr.mxu0 0.0
        %699 = vmatpush1.msra.mxu0 0.0
        %700 = vmatprep.subr.mxu0 0.0
        %701 = vmatpush1.msra.mxu0 0.0
        %702 = vmatprep.subr.mxu0 0.0
        %703 = vmatpush1.msra.mxu0 0.0
        %704 = vmatprep.subr.mxu0 0.0
        %705 = vmatpush1.msra.mxu0 0.0
        %706 = vmatprep.subr.mxu0 0.0
        %707 = vmatpush1.msra.mxu0 0.0
        %708 = vmatprep.subr.mxu0 0.0
        %709 = vmatpush1.msra.mxu0 0.0
        %710 = vmatprep.subr.mxu0 0.0
        %711 = vmatpush1.msra.mxu0 0.0
        %712 = vmatprep.subr.mxu0 0.0
        %713 = vmatpush1.msra.mxu0 0.0
        %714 = vmatprep.subr.mxu0 0.0
        %715 = vmatpush1.msra.mxu0 0.0
        %716 = vmatprep.subr.mxu0 0.0
        %717 = vmatpush1.msra.mxu0 0.0
        %718 = vmatprep.subr.mxu0 0.0
        %719 = vmatpush1.msra.mxu0 0.0
        %720 = vmatprep.subr.mxu0 0.0
        %721 = vmatpush1.msra.mxu0 0.0
        %722 = vmatprep.subr.mxu0 0.0
        %723 = vmatpush1.msra.mxu0 0.0
        %724 = vmatprep.subr.mxu0 0.0
        %725 = vmatpush1.msra.mxu0 0.0
        %726 = vmatprep.subr.mxu0 0.0
        %727 = vmatpush1.msra.mxu0 0.0
        %728 = vmatprep.subr.mxu0 0.0
        %729 = vmatpush1.msra.mxu0 0.0
        %730 = vmatprep.subr.mxu0 0.0
        %731 = vmatpush1.msra.mxu0 0.0
        %732 = vmatprep.subr.mxu0 0.0
        %733 = vmatpush1.msra.mxu0 0.0
        %734 = vmatprep.subr.mxu0 0.0
        %735 = vmatpush1.msra.mxu0 0.0
        %736 = vmatprep.subr.mxu0 0.0
        %737 = vmatpush1.msra.mxu0 0.0
        %738 = vmatprep.subr.mxu0 0.0
        %739 = vmatpush1.msra.mxu0 0.0
        %740 = vmatprep.subr.mxu0 0.0
        %741 = vmatpush1.msra.mxu0 0.0
        %742 = vmatprep.subr.mxu0 0.0
        %743 = vmatpush1.msra.mxu0 0.0
        %744 = vmatprep.subr.mxu0 0.0
        %745 = vmatpush1.msra.mxu0 0.0
        %746 = vmatprep.subr.mxu0 0.0
        %747 = vmatpush1.msra.mxu0 0.0
        %748 = vmatprep.subr.mxu0 0.0
        %749 = vmatpush1.msra.mxu0 0.0
        %750 = vmatprep.subr.mxu0 0.0
        %751 = vmatpush1.msra.mxu0 0.0
        %752 = vmatprep.mubr.f32.mxu0 0.0
        %753 = vmatmul.mubr.f32.gmra.mrb[0].mxu0 %v683
        %v754 = vpop.f32.mrb[0].mxu0
        %v755 = vadd.f32 0.0, %v754
        %v756 = vpop.f32.mrb[0].mxu0
        %757 = vmatprep.mubr.f32.mxu0 0.0
        %758 = vmatmul.mubr.f32.gmra.mrb[0].mxu0 %v686
        %v759 = vpop.f32.mrb[0].mxu0
        %v760 = vadd.f32 0.0, %v759
        %v761 = vpop.f32.mrb[0].mxu0
        %762 = vdwg.mxu0
        %v764 = vsel %vm334, %v755, 0
        %v767 = vsel %vm334, %v760, 0
        %769 = vmatprep.subr.mxu0 0.0
        %770 = vmatpush1.msra.mxu0 %v674
        %771 = vmatprep.subr.mxu0 0.0
        %772 = vmatpush1.msra.mxu0 %v679
        %773 = vmatprep.subr.mxu0 0.0
        %774 = vmatpush1.msra.mxu0 0.0
        %775 = vmatprep.subr.mxu0 0.0
        %776 = vmatpush1.msra.mxu0 0.0
        %777 = vmatprep.subr.mxu0 0.0
        %778 = vmatpush1.msra.mxu0 0.0
        %779 = vmatprep.subr.mxu0 0.0
        %780 = vmatpush1.msra.mxu0 0.0
        %781 = vmatprep.subr.mxu0 0.0
        %782 = vmatpush1.msra.mxu0 0.0
        %783 = vmatprep.subr.mxu0 0.0
        %784 = vmatpush1.msra.mxu0 0.0
        %785 = vmatprep.subr.mxu0 0.0
        %786 = vmatpush1.msra.mxu0 0.0
        %787 = vmatprep.subr.mxu0 0.0
        %788 = vmatpush1.msra.mxu0 0.0
        %789 = vmatprep.subr.mxu0 0.0
        %790 = vmatpush1.msra.mxu0 0.0
        %791 = vmatprep.subr.mxu0 0.0
        %792 = vmatpush1.msra.mxu0 0.0
        %793 = vmatprep.subr.mxu0 0.0
        %794 = vmatpush1.msra.mxu0 0.0
        %795 = vmatprep.subr.mxu0 0.0
        %796 = vmatpush1.msra.mxu0 0.0
        %797 = vmatprep.subr.mxu0 0.0
        %798 = vmatpush1.msra.mxu0 0.0
        %799 = vmatprep.subr.mxu0 0.0
        %800 = vmatpush1.msra.mxu0 0.0
        %801 = vmatprep.subr.mxu0 0.0
        %802 = vmatpush1.msra.mxu0 0.0
        %803 = vmatprep.subr.mxu0 0.0
        %804 = vmatpush1.msra.mxu0 0.0
        %805 = vmatprep.subr.mxu0 0.0
        %806 = vmatpush1.msra.mxu0 0.0
        %807 = vmatprep.subr.mxu0 0.0
        %808 = vmatpush1.msra.mxu0 0.0
        %809 = vmatprep.subr.mxu0 0.0
        %810 = vmatpush1.msra.mxu0 0.0
        %811 = vmatprep.subr.mxu0 0.0
        %812 = vmatpush1.msra.mxu0 0.0
        %813 = vmatprep.subr.mxu0 0.0
        %814 = vmatpush1.msra.mxu0 0.0
        %815 = vmatprep.subr.mxu0 0.0
        %816 = vmatpush1.msra.mxu0 0.0
        %817 = vmatprep.subr.mxu0 0.0
        %818 = vmatpush1.msra.mxu0 0.0
        %819 = vmatprep.subr.mxu0 0.0
        %820 = vmatpush1.msra.mxu0 0.0
        %821 = vmatprep.subr.mxu0 0.0
        %822 = vmatpush1.msra.mxu0 0.0
        %823 = vmatprep.subr.mxu0 0.0
        %824 = vmatpush1.msra.mxu0 0.0
        %825 = vmatprep.subr.mxu0 0.0
        %826 = vmatpush1.msra.mxu0 0.0
        %827 = vmatprep.subr.mxu0 0.0
        %828 = vmatpush1.msra.mxu0 0.0
        %829 = vmatprep.subr.mxu0 0.0
        %830 = vmatpush1.msra.mxu0 0.0
        %831 = vmatprep.subr.mxu0 0.0
        %832 = vmatpush1.msra.mxu0 0.0
        %833 = vmatprep.mubr.f32.mxu0 0.0
        %834 = vmatmul.mubr.f32.gmra.mrb[0].mxu0 %v764
        %v835 = vpop.f32.mrb[0].mxu0
        %v836 = vadd.f32 0.0, %v835
        %v837 = vpop.f32.mrb[0].mxu0
        %838 = vmatprep.mubr.f32.mxu0 0.0
        %839 = vmatmul.mubr.f32.gmra.mrb[0].mxu0 %v767
        %v840 = vpop.f32.mrb[0].mxu0
        %v841 = vadd.f32 0.0, %v840
        %v842 = vpop.f32.mrb[0].mxu0
        %843 = vdwg.mxu0
        %v844 = vsub.f32 %v411, %v836
        %v845 = vsub.f32 %v412, %v841
        %v846 = vmul.f32 %v844, 0.5
        %v847 = vmul.f32 %v845, 0.5
        %v849 = vsel %vm334, %v674, 0
        %v852 = vsel %vm334, %v679, 0
        %854 = vmatprep.subr.mxu0 0.0
        %855 = vmatpush1.msra.mxu0 %v846
        %856 = vmatprep.subr.mxu0 0.0
        %857 = vmatpush1.msra.mxu0 %v847
        %858 = vmatprep.subr.mxu0 0.0
        %859 = vmatpush1.msra.mxu0 0.0
        %860 = vmatprep.subr.mxu0 0.0
        %861 = vmatpush1.msra.mxu0 0.0
        %862 = vmatprep.subr.mxu0 0.0
        %863 = vmatpush1.msra.mxu0 0.0
        %864 = vmatprep.subr.mxu0 0.0
        %865 = vmatpush1.msra.mxu0 0.0
        %866 = vmatprep.subr.mxu0 0.0
        %867 = vmatpush1.msra.mxu0 0.0
        %868 = vmatprep.subr.mxu0 0.0
        %869 = vmatpush1.msra.mxu0 0.0
        %870 = vmatprep.subr.mxu0 0.0
        %871 = vmatpush1.msra.mxu0 0.0
        %872 = vmatprep.subr.mxu0 0.0
        %873 = vmatpush1.msra.mxu0 0.0
        %874 = vmatprep.subr.mxu0 0.0
        %875 = vmatpush1.msra.mxu0 0.0
        %876 = vmatprep.subr.mxu0 0.0
        %877 = vmatpush1.msra.mxu0 0.0
        %878 = vmatprep.subr.mxu0 0.0
        %879 = vmatpush1.msra.mxu0 0.0
        %880 = vmatprep.subr.mxu0 0.0
        %881 = vmatpush1.msra.mxu0 0.0
        %882 = vmatprep.subr.mxu0 0.0
        %883 = vmatpush1.msra.mxu0 0.0
        %884 = vmatprep.subr.mxu0 0.0
        %885 = vmatpush1.msra.mxu0 0.0
        %886 = vmatprep.subr.mxu0 0.0
        %887 = vmatpush1.msra.mxu0 0.0
        %888 = vmatprep.subr.mxu0 0.0
        %889 = vmatpush1.msra.mxu0 0.0
        %890 = vmatprep.subr.mxu0 0.0
        %891 = vmatpush1.msra.mxu0 0.0
        %892 = vmatprep.subr.mxu0 0.0
        %893 = vmatpush1.msra.mxu0 0.0
        %894 = vmatprep.subr.mxu0 0.0
        %895 = vmatpush1.msra.mxu0 0.0
        %896 = vmatprep.subr.mxu0 0.0
        %897 = vmatpush1.msra.mxu0 0.0
        %898 = vmatprep.subr.mxu0 0.0
        %899 = vmatpush1.msra.mxu0 0.0
        %900 = vmatprep.subr.mxu0 0.0
        %901 = vmatpush1.msra.mxu0 0.0
        %902 = vmatprep.subr.mxu0 0.0
        %903 = vmatpush1.msra.mxu0 0.0
        %904 = vmatprep.subr.mxu0 0.0
        %905 = vmatpush1.msra.mxu0 0.0
        %906 = vmatprep.subr.mxu0 0.0
        %907 = vmatpush1.msra.mxu0 0.0
        %908 = vmatprep.subr.mxu0 0.0
        %909 = vmatpush1.msra.mxu0 0.0
        %910 = vmatprep.subr.mxu0 0.0
        %911 = vmatpush1.msra.mxu0 0.0
        %912 = vmatprep.subr.mxu0 0.0
        %913 = vmatpush1.msra.mxu0 0.0
        %914 = vmatprep.subr.mxu0 0.0
        %915 = vmatpush1.msra.mxu0 0.0
        %916 = vmatprep.subr.mxu0 0.0
        %917 = vmatpush1.msra.mxu0 0.0
        %918 = vmatprep.mubr.f32.mxu0 0.0
        %919 = vmatmul.mubr.f32.gmra.mrb[0].mxu0 %v849
        %v920 = vpop.f32.mrb[0].mxu0
        %v921 = vadd.f32 0.0, %v920
        %v922 = vpop.f32.mrb[0].mxu0
        %923 = vmatprep.mubr.f32.mxu0 0.0
        %924 = vmatmul.mubr.f32.gmra.mrb[0].mxu0 %v852
        %v925 = vpop.f32.mrb[0].mxu0
        %v926 = vadd.f32 0.0, %v925
        %v927 = vpop.f32.mrb[0].mxu0
        %928 = vdwg.mxu0
        %v930 = vsel %vm334, %v846, 0
        %v933 = vsel %vm334, %v847, 0
        %935 = vmatprep.subr.mxu0 0.0
        %936 = vmatpush1.msra.mxu0 %v755
        %937 = vmatprep.subr.mxu0 0.0
        %938 = vmatpush1.msra.mxu0 %v760
        %939 = vmatprep.subr.mxu0 0.0
        %940 = vmatpush1.msra.mxu0 0.0
        %941 = vmatprep.subr.mxu0 0.0
        %942 = vmatpush1.msra.mxu0 0.0
        %943 = vmatprep.subr.mxu0 0.0
        %944 = vmatpush1.msra.mxu0 0.0
        %945 = vmatprep.subr.mxu0 0.0
        %946 = vmatpush1.msra.mxu0 0.0
        %947 = vmatprep.subr.mxu0 0.0
        %948 = vmatpush1.msra.mxu0 0.0
        %949 = vmatprep.subr.mxu0 0.0
        %950 = vmatpush1.msra.mxu0 0.0
        %951 = vmatprep.subr.mxu0 0.0
        %952 = vmatpush1.msra.mxu0 0.0
        %953 = vmatprep.subr.mxu0 0.0
        %954 = vmatpush1.msra.mxu0 0.0
        %955 = vmatprep.subr.mxu0 0.0
        %956 = vmatpush1.msra.mxu0 0.0
        %957 = vmatprep.subr.mxu0 0.0
        %958 = vmatpush1.msra.mxu0 0.0
        %959 = vmatprep.subr.mxu0 0.0
        %960 = vmatpush1.msra.mxu0 0.0
        %961 = vmatprep.subr.mxu0 0.0
        %962 = vmatpush1.msra.mxu0 0.0
        %963 = vmatprep.subr.mxu0 0.0
        %964 = vmatpush1.msra.mxu0 0.0
        %965 = vmatprep.subr.mxu0 0.0
        %966 = vmatpush1.msra.mxu0 0.0
        %967 = vmatprep.subr.mxu0 0.0
        %968 = vmatpush1.msra.mxu0 0.0
        %969 = vmatprep.subr.mxu0 0.0
        %970 = vmatpush1.msra.mxu0 0.0
        %971 = vmatprep.subr.mxu0 0.0
        %972 = vmatpush1.msra.mxu0 0.0
        %973 = vmatprep.subr.mxu0 0.0
        %974 = vmatpush1.msra.mxu0 0.0
        %975 = vmatprep.subr.mxu0 0.0
        %976 = vmatpush1.msra.mxu0 0.0
        %977 = vmatprep.subr.mxu0 0.0
        %978 = vmatpush1.msra.mxu0 0.0
        %979 = vmatprep.subr.mxu0 0.0
        %980 = vmatpush1.msra.mxu0 0.0
        %981 = vmatprep.subr.mxu0 0.0
        %982 = vmatpush1.msra.mxu0 0.0
        %983 = vmatprep.subr.mxu0 0.0
        %984 = vmatpush1.msra.mxu0 0.0
        %985 = vmatprep.subr.mxu0 0.0
        %986 = vmatpush1.msra.mxu0 0.0
        %987 = vmatprep.subr.mxu0 0.0
        %988 = vmatpush1.msra.mxu0 0.0
        %989 = vmatprep.subr.mxu0 0.0
        %990 = vmatpush1.msra.mxu0 0.0
        %991 = vmatprep.subr.mxu0 0.0
        %992 = vmatpush1.msra.mxu0 0.0
        %993 = vmatprep.subr.mxu0 0.0
        %994 = vmatpush1.msra.mxu0 0.0
        %995 = vmatprep.subr.mxu0 0.0
        %996 = vmatpush1.msra.mxu0 0.0
        %997 = vmatprep.subr.mxu0 0.0
        %998 = vmatpush1.msra.mxu0 0.0
        %999 = vmatprep.mubr.f32.mxu0 0.0
        %1000 = vmatmul.mubr.f32.gmra.mrb[0].mxu0 %v930
        %v1001 = vpop.f32.mrb[0].mxu0
        %v1002 = vadd.f32 0.0, %v1001
        %v1003 = vpop.f32.mrb[0].mxu0
        %1004 = vmatprep.mubr.f32.mxu0 0.0
        %1005 = vmatmul.mubr.f32.gmra.mrb[0].mxu0 %v933
        %v1006 = vpop.f32.mrb[0].mxu0
        %v1007 = vadd.f32 0.0, %v1006
        %v1008 = vpop.f32.mrb[0].mxu0
        %1009 = vdwg.mxu0
        %v1011 = vsel %vm334, %v1002, 0
        %v1014 = vsel %vm334, %v1007, 0
        %1016 = vmatprep.subr.mxu0 0.0
        %1017 = vmatpush1.msra.mxu0 %v921
        %1018 = vmatprep.subr.mxu0 0.0
        %1019 = vmatpush1.msra.mxu0 %v926
        %1020 = vmatprep.subr.mxu0 0.0
        %1021 = vmatpush1.msra.mxu0 0.0
        %1022 = vmatprep.subr.mxu0 0.0
        %1023 = vmatpush1.msra.mxu0 0.0
        %1024 = vmatprep.subr.mxu0 0.0
        %1025 = vmatpush1.msra.mxu0 0.0
        %1026 = vmatprep.subr.mxu0 0.0
        %1027 = vmatpush1.msra.mxu0 0.0
        %1028 = vmatprep.subr.mxu0 0.0
        %1029 = vmatpush1.msra.mxu0 0.0
        %1030 = vmatprep.subr.mxu0 0.0
        %1031 = vmatpush1.msra.mxu0 0.0
        %1032 = vmatprep.subr.mxu0 0.0
        %1033 = vmatpush1.msra.mxu0 0.0
        %1034 = vmatprep.subr.mxu0 0.0
        %1035 = vmatpush1.msra.mxu0 0.0
        %1036 = vmatprep.subr.mxu0 0.0
        %1037 = vmatpush1.msra.mxu0 0.0
        %1038 = vmatprep.subr.mxu0 0.0
        %1039 = vmatpush1.msra.mxu0 0.0
        %1040 = vmatprep.subr.mxu0 0.0
        %1041 = vmatpush1.msra.mxu0 0.0
        %1042 = vmatprep.subr.mxu0 0.0
        %1043 = vmatpush1.msra.mxu0 0.0
        %1044 = vmatprep.subr.mxu0 0.0
        %1045 = vmatpush1.msra.mxu0 0.0
        %1046 = vmatprep.subr.mxu0 0.0
        %1047 = vmatpush1.msra.mxu0 0.0
        %1048 = vmatprep.subr.mxu0 0.0
        %1049 = vmatpush1.msra.mxu0 0.0
        %1050 = vmatprep.subr.mxu0 0.0
        %1051 = vmatpush1.msra.mxu0 0.0
        %1052 = vmatprep.subr.mxu0 0.0
        %1053 = vmatpush1.msra.mxu0 0.0
        %1054 = vmatprep.subr.mxu0 0.0
        %1055 = vmatpush1.msra.mxu0 0.0
        %1056 = vmatprep.subr.mxu0 0.0
        %1057 = vmatpush1.msra.mxu0 0.0
        %1058 = vmatprep.subr.mxu0 0.0
        %1059 = vmatpush1.msra.mxu0 0.0
        %1060 = vmatprep.subr.mxu0 0.0
        %1061 = vmatpush1.msra.mxu0 0.0
        %1062 = vmatprep.subr.mxu0 0.0
        %1063 = vmatpush1.msra.mxu0 0.0
        %1064 = vmatprep.subr.mxu0 0.0
        %1065 = vmatpush1.msra.mxu0 0.0
        %1066 = vmatprep.subr.mxu0 0.0
        %1067 = vmatpush1.msra.mxu0 0.0
        %1068 = vmatprep.subr.mxu0 0.0
        %1069 = vmatpush1.msra.mxu0 0.0
        %1070 = vmatprep.subr.mxu0 0.0
        %1071 = vmatpush1.msra.mxu0 0.0
        %1072 = vmatprep.subr.mxu0 0.0
        %1073 = vmatpush1.msra.mxu0 0.0
        %1074 = vmatprep.subr.mxu0 0.0
        %1075 = vmatpush1.msra.mxu0 0.0
        %1076 = vmatprep.subr.mxu0 0.0
        %1077 = vmatpush1.msra.mxu0 0.0
        %1078 = vmatprep.subr.mxu0 0.0
        %1079 = vmatpush1.msra.mxu0 0.0
        %1080 = vmatprep.mubr.f32.mxu0 0.0
        %1081 = vmatmul.mubr.f32.gmra.mrb[0].mxu0 %v1011
        %v1082 = vpop.f32.mrb[0].mxu0
        %v1083 = vadd.f32 0.0, %v1082
        %v1084 = vpop.f32.mrb[0].mxu0
        %1085 = vmatprep.mubr.f32.mxu0 0.0
        %1086 = vmatmul.mubr.f32.gmra.mrb[0].mxu0 %v1014
        %v1087 = vpop.f32.mrb[0].mxu0
        %v1088 = vadd.f32 0.0, %v1087
        %v1089 = vpop.f32.mrb[0].mxu0
        %1090 = vdwg.mxu0
        %v1091 = vsub.f32 %v411, %v1083
        %v1092 = vsub.f32 %v412, %v1088
        %v1093 = vmul.f32 %v1091, 0.5
        %v1094 = vmul.f32 %v1092, 0.5
        %v1096 = vsel %vm334, %v921, 0
        %v1099 = vsel %vm334, %v926, 0
        %1101 = vmatprep.subr.mxu0 0.0
        %1102 = vmatpush1.msra.mxu0 %v1093
        %1103 = vmatprep.subr.mxu0 0.0
        %1104 = vmatpush1.msra.mxu0 %v1094
        %1105 = vmatprep.subr.mxu0 0.0
        %1106 = vmatpush1.msra.mxu0 0.0
        %1107 = vmatprep.subr.mxu0 0.0
        %1108 = vmatpush1.msra.mxu0 0.0
        %1109 = vmatprep.subr.mxu0 0.0
        %1110 = vmatpush1.msra.mxu0 0.0
        %1111 = vmatprep.subr.mxu0 0.0
        %1112 = vmatpush1.msra.mxu0 0.0
        %1113 = vmatprep.subr.mxu0 0.0
        %1114 = vmatpush1.msra.mxu0 0.0
        %1115 = vmatprep.subr.mxu0 0.0
        %1116 = vmatpush1.msra.mxu0 0.0
        %1117 = vmatprep.subr.mxu0 0.0
        %1118 = vmatpush1.msra.mxu0 0.0
        %1119 = vmatprep.subr.mxu0 0.0
        %1120 = vmatpush1.msra.mxu0 0.0
        %1121 = vmatprep.subr.mxu0 0.0
        %1122 = vmatpush1.msra.mxu0 0.0
        %1123 = vmatprep.subr.mxu0 0.0
        %1124 = vmatpush1.msra.mxu0 0.0
        %1125 = vmatprep.subr.mxu0 0.0
        %1126 = vmatpush1.msra.mxu0 0.0
        %1127 = vmatprep.subr.mxu0 0.0
        %1128 = vmatpush1.msra.mxu0 0.0
        %1129 = vmatprep.subr.mxu0 0.0
        %1130 = vmatpush1.msra.mxu0 0.0
        %1131 = vmatprep.subr.mxu0 0.0
        %1132 = vmatpush1.msra.mxu0 0.0
        %1133 = vmatprep.subr.mxu0 0.0
        %1134 = vmatpush1.msra.mxu0 0.0
        %1135 = vmatprep.subr.mxu0 0.0
        %1136 = vmatpush1.msra.mxu0 0.0
        %1137 = vmatprep.subr.mxu0 0.0
        %1138 = vmatpush1.msra.mxu0 0.0
        %1139 = vmatprep.subr.mxu0 0.0
        %1140 = vmatpush1.msra.mxu0 0.0
        %1141 = vmatprep.subr.mxu0 0.0
        %1142 = vmatpush1.msra.mxu0 0.0
        %1143 = vmatprep.subr.mxu0 0.0
        %1144 = vmatpush1.msra.mxu0 0.0
        %1145 = vmatprep.subr.mxu0 0.0
        %1146 = vmatpush1.msra.mxu0 0.0
        %1147 = vmatprep.subr.mxu0 0.0
        %1148 = vmatpush1.msra.mxu0 0.0
        %1149 = vmatprep.subr.mxu0 0.0
        %1150 = vmatpush1.msra.mxu0 0.0
        %1151 = vmatprep.subr.mxu0 0.0
        %1152 = vmatpush1.msra.mxu0 0.0
        %1153 = vmatprep.subr.mxu0 0.0
        %1154 = vmatpush1.msra.mxu0 0.0
        %1155 = vmatprep.subr.mxu0 0.0
        %1156 = vmatpush1.msra.mxu0 0.0
        %1157 = vmatprep.subr.mxu0 0.0
        %1158 = vmatpush1.msra.mxu0 0.0
        %1159 = vmatprep.subr.mxu0 0.0
        %1160 = vmatpush1.msra.mxu0 0.0
        %1161 = vmatprep.subr.mxu0 0.0
        %1162 = vmatpush1.msra.mxu0 0.0
        %1163 = vmatprep.subr.mxu0 0.0
        %1164 = vmatpush1.msra.mxu0 0.0
        %1165 = vmatprep.mubr.f32.mxu0 0.0
        %1166 = vmatmul.mubr.f32.gmra.mrb[0].mxu0 %v1096
        %v1167 = vpop.f32.mrb[0].mxu0
        %v1168 = vadd.f32 0.0, %v1167
        %v1169 = vpop.f32.mrb[0].mxu0
        %1170 = vmatprep.mubr.f32.mxu0 0.0
        %1171 = vmatmul.mubr.f32.gmra.mrb[0].mxu0 %v1099
        %v1172 = vpop.f32.mrb[0].mxu0
        %v1173 = vadd.f32 0.0, %v1172
        %v1174 = vpop.f32.mrb[0].mxu0
        %1175 = vdwg.mxu0
        %v1177 = vsel %vm334, %v1093, 0
        %v1180 = vsel %vm334, %v1094, 0
        %1182 = vmatprep.subr.mxu0 0.0
        %1183 = vmatpush1.msra.mxu0 %v1002
        %1184 = vmatprep.subr.mxu0 0.0
        %1185 = vmatpush1.msra.mxu0 %v1007
        %1186 = vmatprep.subr.mxu0 0.0
        %1187 = vmatpush1.msra.mxu0 0.0
        %1188 = vmatprep.subr.mxu0 0.0
        %1189 = vmatpush1.msra.mxu0 0.0
        %1190 = vmatprep.subr.mxu0 0.0
        %1191 = vmatpush1.msra.mxu0 0.0
        %1192 = vmatprep.subr.mxu0 0.0
        %1193 = vmatpush1.msra.mxu0 0.0
        %1194 = vmatprep.subr.mxu0 0.0
        %1195 = vmatpush1.msra.mxu0 0.0
        %1196 = vmatprep.subr.mxu0 0.0
        %1197 = vmatpush1.msra.mxu0 0.0
        %1198 = vmatprep.subr.mxu0 0.0
        %1199 = vmatpush1.msra.mxu0 0.0
        %1200 = vmatprep.subr.mxu0 0.0
        %1201 = vmatpush1.msra.mxu0 0.0
        %1202 = vmatprep.subr.mxu0 0.0
        %1203 = vmatpush1.msra.mxu0 0.0
        %1204 = vmatprep.subr.mxu0 0.0
        %1205 = vmatpush1.msra.mxu0 0.0
        %1206 = vmatprep.subr.mxu0 0.0
        %1207 = vmatpush1.msra.mxu0 0.0
        %1208 = vmatprep.subr.mxu0 0.0
        %1209 = vmatpush1.msra.mxu0 0.0
        %1210 = vmatprep.subr.mxu0 0.0
        %1211 = vmatpush1.msra.mxu0 0.0
        %1212 = vmatprep.subr.mxu0 0.0
        %1213 = vmatpush1.msra.mxu0 0.0
        %1214 = vmatprep.subr.mxu0 0.0
        %1215 = vmatpush1.msra.mxu0 0.0
        %1216 = vmatprep.subr.mxu0 0.0
        %1217 = vmatpush1.msra.mxu0 0.0
        %1218 = vmatprep.subr.mxu0 0.0
        %1219 = vmatpush1.msra.mxu0 0.0
        %1220 = vmatprep.subr.mxu0 0.0
        %1221 = vmatpush1.msra.mxu0 0.0
        %1222 = vmatprep.subr.mxu0 0.0
        %1223 = vmatpush1.msra.mxu0 0.0
        %1224 = vmatprep.subr.mxu0 0.0
        %1225 = vmatpush1.msra.mxu0 0.0
        %1226 = vmatprep.subr.mxu0 0.0
        %1227 = vmatpush1.msra.mxu0 0.0
        %1228 = vmatprep.subr.mxu0 0.0
        %1229 = vmatpush1.msra.mxu0 0.0
        %1230 = vmatprep.subr.mxu0 0.0
        %1231 = vmatpush1.msra.mxu0 0.0
        %1232 = vmatprep.subr.mxu0 0.0
        %1233 = vmatpush1.msra.mxu0 0.0
        %1234 = vmatprep.subr.mxu0 0.0
        %1235 = vmatpush1.msra.mxu0 0.0
        %1236 = vmatprep.subr.mxu0 0.0
        %1237 = vmatpush1.msra.mxu0 0.0
        %1238 = vmatprep.subr.mxu0 0.0
        %1239 = vmatpush1.msra.mxu0 0.0
        %1240 = vmatprep.subr.mxu0 0.0
        %1241 = vmatpush1.msra.mxu0 0.0
        %1242 = vmatprep.subr.mxu0 0.0
        %1243 = vmatpush1.msra.mxu0 0.0
        %1244 = vmatprep.subr.mxu0 0.0
        %1245 = vmatpush1.msra.mxu0 0.0
        %1246 = vmatprep.mubr.f32.mxu0 0.0
        %1247 = vmatmul.mubr.f32.gmra.mrb[0].mxu0 %v1177
        %v1248 = vpop.f32.mrb[0].mxu0
        %v1249 = vadd.f32 0.0, %v1248
        %v1250 = vpop.f32.mrb[0].mxu0
        %1251 = vmatprep.mubr.f32.mxu0 0.0
        %1252 = vmatmul.mubr.f32.gmra.mrb[0].mxu0 %v1180
        %v1253 = vpop.f32.mrb[0].mxu0
        %v1254 = vadd.f32 0.0, %v1253
        %v1255 = vpop.f32.mrb[0].mxu0
        %1256 = vdwg.mxu0
        %v1258 = vsel %vm334, %v1249, 0
        %v1261 = vsel %vm334, %v1254, 0
        %1263 = vmatprep.subr.mxu0 0.0
        %1264 = vmatpush1.msra.mxu0 %v1168
        %1265 = vmatprep.subr.mxu0 0.0
        %1266 = vmatpush1.msra.mxu0 %v1173
        %1267 = vmatprep.subr.mxu0 0.0
        %1268 = vmatpush1.msra.mxu0 0.0
        %1269 = vmatprep.subr.mxu0 0.0
        %1270 = vmatpush1.msra.mxu0 0.0
        %1271 = vmatprep.subr.mxu0 0.0
        %1272 = vmatpush1.msra.mxu0 0.0
        %1273 = vmatprep.subr.mxu0 0.0
        %1274 = vmatpush1.msra.mxu0 0.0
        %1275 = vmatprep.subr.mxu0 0.0
        %1276 = vmatpush1.msra.mxu0 0.0
        %1277 = vmatprep.subr.mxu0 0.0
        %1278 = vmatpush1.msra.mxu0 0.0
        %1279 = vmatprep.subr.mxu0 0.0
        %1280 = vmatpush1.msra.mxu0 0.0
        %1281 = vmatprep.subr.mxu0 0.0
        %1282 = vmatpush1.msra.mxu0 0.0
        %1283 = vmatprep.subr.mxu0 0.0
        %1284 = vmatpush1.msra.mxu0 0.0
        %1285 = vmatprep.subr.mxu0 0.0
        %1286 = vmatpush1.msra.mxu0 0.0
        %1287 = vmatprep.subr.mxu0 0.0
        %1288 = vmatpush1.msra.mxu0 0.0
        %1289 = vmatprep.subr.mxu0 0.0
        %1290 = vmatpush1.msra.mxu0 0.0
        %1291 = vmatprep.subr.mxu0 0.0
        %1292 = vmatpush1.msra.mxu0 0.0
        %1293 = vmatprep.subr.mxu0 0.0
        %1294 = vmatpush1.msra.mxu0 0.0
        %1295 = vmatprep.subr.mxu0 0.0
        %1296 = vmatpush1.msra.mxu0 0.0
        %1297 = vmatprep.subr.mxu0 0.0
        %1298 = vmatpush1.msra.mxu0 0.0
        %1299 = vmatprep.subr.mxu0 0.0
        %1300 = vmatpush1.msra.mxu0 0.0
        %1301 = vmatprep.subr.mxu0 0.0
        %1302 = vmatpush1.msra.mxu0 0.0
        %1303 = vmatprep.subr.mxu0 0.0
        %1304 = vmatpush1.msra.mxu0 0.0
        %1305 = vmatprep.subr.mxu0 0.0
        %1306 = vmatpush1.msra.mxu0 0.0
        %1307 = vmatprep.subr.mxu0 0.0
        %1308 = vmatpush1.msra.mxu0 0.0
        %1309 = vmatprep.subr.mxu0 0.0
        %1310 = vmatpush1.msra.mxu0 0.0
        %1311 = vmatprep.subr.mxu0 0.0
        %1312 = vmatpush1.msra.mxu0 0.0
        %1313 = vmatprep.subr.mxu0 0.0
        %1314 = vmatpush1.msra.mxu0 0.0
        %1315 = vmatprep.subr.mxu0 0.0
        %1316 = vmatpush1.msra.mxu0 0.0
        %1317 = vmatprep.subr.mxu0 0.0
        %1318 = vmatpush1.msra.mxu0 0.0
        %1319 = vmatprep.subr.mxu0 0.0
        %1320 = vmatpush1.msra.mxu0 0.0
        %1321 = vmatprep.subr.mxu0 0.0
        %1322 = vmatpush1.msra.mxu0 0.0
        %1323 = vmatprep.subr.mxu0 0.0
        %1324 = vmatpush1.msra.mxu0 0.0
        %1325 = vmatprep.subr.mxu0 0.0
        %1326 = vmatpush1.msra.mxu0 0.0
        %1327 = vmatprep.mubr.f32.mxu0 0.0
        %1328 = vmatmul.mubr.f32.gmra.mrb[0].mxu0 %v1258
        %v1329 = vpop.f32.mrb[0].mxu0
        %v1330 = vadd.f32 0.0, %v1329
        %v1331 = vpop.f32.mrb[0].mxu0
        %1332 = vmatprep.mubr.f32.mxu0 0.0
        %1333 = vmatmul.mubr.f32.gmra.mrb[0].mxu0 %v1261
        %v1334 = vpop.f32.mrb[0].mxu0
        %v1335 = vadd.f32 0.0, %v1334
        %v1336 = vpop.f32.mrb[0].mxu0
        %1337 = vdwg.mxu0
        %v1338 = vsub.f32 %v411, %v1330
        %v1339 = vsub.f32 %v412, %v1335
        %v1341 = vsel %vm334, %v1168, 0
        %v1344 = vsel %vm334, %v1173, 0
        %1346 = vmatprep.subr.mxu0 0.0
        %1347 = vmatpush1.msra.mxu0 %v1338
        %1348 = vmatprep.subr.mxu0 0.0
        %1349 = vmatpush1.msra.mxu0 %v1339
        %1350 = vmatprep.subr.mxu0 0.0
        %1351 = vmatpush1.msra.mxu0 0.0
        %1352 = vmatprep.subr.mxu0 0.0
        %1353 = vmatpush1.msra.mxu0 0.0
        %1354 = vmatprep.subr.mxu0 0.0
        %1355 = vmatpush1.msra.mxu0 0.0
        %1356 = vmatprep.subr.mxu0 0.0
        %1357 = vmatpush1.msra.mxu0 0.0
        %1358 = vmatprep.subr.mxu0 0.0
        %1359 = vmatpush1.msra.mxu0 0.0
        %1360 = vmatprep.subr.mxu0 0.0
        %1361 = vmatpush1.msra.mxu0 0.0
        %1362 = vmatprep.subr.mxu0 0.0
        %1363 = vmatpush1.msra.mxu0 0.0
        %1364 = vmatprep.subr.mxu0 0.0
        %1365 = vmatpush1.msra.mxu0 0.0
        %1366 = vmatprep.subr.mxu0 0.0
        %1367 = vmatpush1.msra.mxu0 0.0
        %1368 = vmatprep.subr.mxu0 0.0
        %1369 = vmatpush1.msra.mxu0 0.0
        %1370 = vmatprep.subr.mxu0 0.0
        %1371 = vmatpush1.msra.mxu0 0.0
        %1372 = vmatprep.subr.mxu0 0.0
        %1373 = vmatpush1.msra.mxu0 0.0
        %1374 = vmatprep.subr.mxu0 0.0
        %1375 = vmatpush1.msra.mxu0 0.0
        %1376 = vmatprep.subr.mxu0 0.0
        %1377 = vmatpush1.msra.mxu0 0.0
        %1378 = vmatprep.subr.mxu0 0.0
        %1379 = vmatpush1.msra.mxu0 0.0
        %1380 = vmatprep.subr.mxu0 0.0
        %1381 = vmatpush1.msra.mxu0 0.0
        %1382 = vmatprep.subr.mxu0 0.0
        %1383 = vmatpush1.msra.mxu0 0.0
        %1384 = vmatprep.subr.mxu0 0.0
        %1385 = vmatpush1.msra.mxu0 0.0
        %1386 = vmatprep.subr.mxu0 0.0
        %1387 = vmatpush1.msra.mxu0 0.0
        %1388 = vmatprep.subr.mxu0 0.0
        %1389 = vmatpush1.msra.mxu0 0.0
        %1390 = vmatprep.subr.mxu0 0.0
        %1391 = vmatpush1.msra.mxu0 0.0
        %1392 = vmatprep.subr.mxu0 0.0
        %1393 = vmatpush1.msra.mxu0 0.0
        %1394 = vmatprep.subr.mxu0 0.0
        %1395 = vmatpush1.msra.mxu0 0.0
        %1396 = vmatprep.subr.mxu0 0.0
        %1397 = vmatpush1.msra.mxu0 0.0
        %1398 = vmatprep.subr.mxu0 0.0
        %1399 = vmatpush1.msra.mxu0 0.0
        %1400 = vmatprep.subr.mxu0 0.0
        %1401 = vmatpush1.msra.mxu0 0.0
        %1402 = vmatprep.subr.mxu0 0.0
        %1403 = vmatpush1.msra.mxu0 0.0
        %1404 = vmatprep.subr.mxu0 0.0
        %1405 = vmatpush1.msra.mxu0 0.0
        %1406 = vmatprep.subr.mxu0 0.0
        %1407 = vmatpush1.msra.mxu0 0.0
        %1408 = vmatprep.subr.mxu0 0.0
        %1409 = vmatpush1.msra.mxu0 0.0
        %1410 = vmatprep.mubr.f32.mxu0 0.0
        %1411 = vmatmul.mubr.f32.gmra.mrb[0].mxu0 %v1341
        %v1412 = vpop.f32.mrb[0].mxu0
        %v1413 = vadd.f32 0.0, %v1412
        %v1414 = vpop.f32.mrb[0].mxu0
        %1415 = vmatprep.mubr.f32.mxu0 0.0
        %1416 = vmatmul.mubr.f32.gmra.mrb[0].mxu0 %v1344
        %v1417 = vpop.f32.mrb[0].mxu0
        %v1418 = vadd.f32 0.0, %v1417
        %v1419 = vpop.f32.mrb[0].mxu0
        %1420 = vdwg.mxu0
        %v1421 = vmul.f32 %v1413, 0.5
        %v1422 = vmul.f32 %v1418, 0.5
        %v1423 = vrsqrt.pop %v427
        %v1424 = vmul.f32 %v427, %v1423
        %vm1425 = vcmp.eq.f32.partialorder %v427, inf
        %v1426 = vsel %vm1425, %v427, %v1424
        %vm1427 = vcmp.eq.f32.partialorder %v427, 0.0
        %v1428 = vand.u32 %v427, 2147483648
        %v1429 = vsel %vm1427, %v1428, %v1426
        %v1430 = vmul.f32 %v1421, %v1429
        %v1431 = vmul.f32 %v1422, %v1429
        %v1432 = vsel %vm334, %v1430, 0.0
        %1433 = vadd.xlane.f32.xlu0 %v1432
        %v1434 = vpop.xlane.xlu0 %1433
        %v1435 = vsel %vm334, %v1431, 0.0
        %1436 = vadd.xlane.f32.xlu0 %v1435
        %v1437 = vpop.xlane.xlu0 %1436
        %v1438 = vrcp.pop 16.0
        %v1439 = vmul.f32 %v1434, %v1438
        %v1440 = vmul.f32 %v1437, %v1438
        %v1441 = vld [vmem:[%s1] sm:$0xff]
        %v1442 = vld [vmem:[%s1 + $0x8] sm:$0xff]
        %v1443 = vmul.f32 %v1441, %v1439
        %v1444 = vmul.f32 %v1442, %v1440
        %vm1445 = vcmask 15360
        %v1446 = vsel %vm1445, %v1443, 0.0
        %v1447 = vsel %vm1445, %v1444, 0.0
        %v1448 = vadd.f32 %v1446, %v1447
        %v1449 = vrot.slane %v1448, 4
        %v1450 = vadd.f32 %v1448, %v1449
        %v1451 = vrot.slane %v1450, 2
        %v1452 = vadd.f32 %v1450, %v1451
        %v1453 = vrot.slane %v1452, 1
        %v1454 = vadd.f32 %v1452, %v1453
        %v1455 = vld [vmem:[%s2] sm:$0x1]
        %v1456 = vadd.f32 %v1454, %v1455
        %v1457 = vmax.f32 %v1456, 0.0
        %v1458 = vld [vmem:[%s3] sm:$0xff]
        %v1459 = vld [vmem:[%s3 + $0x8] sm:$0xff]
        %v1460 = vlaneseq
        %v1461 = vshrl.u32 %v1460, 7
        %v1462 = vsub.s32 0, %v1461
        %v1463 = vrot.slane %v1457, %v1462
        %v1464 = vmul.f32 %v1458, %v1463
        %v1465 = vmul.f32 %v1459, %v1463
        %v1466 = vsel %vm1445, %v1464, 0.0
        %1467 = vadd.xlane.f32.xlu0 %v1466
        %v1468 = vpop.xlane.xlu0 %1467
        %v1469 = vsel %vm1445, %v1465, 0.0
        %1470 = vadd.xlane.f32.xlu0 %v1469
        %v1471 = vpop.xlane.xlu0 %1470
        %v1472 = vld [vmem:[%s4] sm:$0xff]
        %v1473 = vld [vmem:[%s4 + $0x8] sm:$0xff]
        %v1474 = vadd.f32 %v1468, %v1472
        %v1475 = vadd.f32 %v1471, %v1473
        %v1476 = vxor.u32 %v1474, 2147483648
        %v1477 = vxor.u32 %v1475, 2147483648
        %v1478 = vmul.f32 %v1476, 1.442695
        %v1479 = vpow.pop %v1478
        %v1480 = vmul.f32 %v1477, 1.442695
        %v1481 = vpow.pop %v1480
        %v1482 = vadd.f32 %v1479, 1.0
        %v1483 = vadd.f32 %v1481, 1.0
        %v1484 = vrcp.pop %v1482
        %v1485 = vmul.f32 1.0, %v1484
        %v1486 = vrcp.pop %v1483
        %v1487 = vmul.f32 1.0, %v1486
        %1488 = vst.msk [vmem:[%s274] sm:$0xff] %vm345, %v1485
        %1489 = vst.msk [vmem:[%s274 + $0x8] sm:$0xff] %vm345, %v1487
      $region52: #{tpu_custom_call.1} parent=43 // pred_fallthru
        _
      %p1490 = scmp.lt.s32.totalorder %s21, 1
      %s1491 = scalar_select %p1490, %s21, 1
      %s1492 = smul.addr %s1491, 2
      %s1493 = smul.addr %s1492, 8
      %s1494 = scalar_lea.vmem %s6, %s1493
      // Predicated region
      $region53: #{tpu_custom_call.1} parent=43 // pred_check
        %p1495 = pneg %p180
      $region54: #{tpu_custom_call.1} parent=43 // pred_check_branch
        %1497 = sbr.rel (%p1495) target = $region56
      $region55: #{tpu_custom_call.1} parent=43 // pred_region
        _
      $region56: #{tpu_custom_call.1} parent=43 // pred_fallthru
        _
    $region44: #{tpu_custom_call.1} parent=5 // pred_fallthru
      _
    %p1498 = scmp.le.s32.totalorder 2, %s12
    // Predicated region
    $region57: #{tpu_custom_call.1} parent=5 // pred_check
      %p1499 = pneg %p1498
    $region58: #{tpu_custom_call.1} parent=5 // pred_check_branch
      %1501 = sbr.rel (%p1499) target = $region60
    $region59: #{tpu_custom_call.1} parent=5 // pred_region
      %s1502 = ssub.s32 %s12, 2
      // Predicated region
      $region61: #{tpu_custom_call.1} parent=59 // pred_check
        %p1503 = pneg %p186
      $region62: #{tpu_custom_call.1} parent=59 // pred_check_branch
        %1505 = sbr.rel (%p1503) target = $region64
      $region63: #{tpu_custom_call.1} parent=59 // pred_region
        %p1506 = scmp.lt.s32.totalorder %s23, 1
        %s1507 = scalar_select %p1506, %s23, 1
        %s1508 = smul.addr %s1507, 2
        %s1509 = smul.addr %s1508, 8
        %s1510 = scalar_lea.vmem %s6, %s1509
      $region64: #{tpu_custom_call.1} parent=59 // pred_fallthru
        _
    $region60: #{tpu_custom_call.1} parent=5 // pred_fallthru
      _
  $region6: #{tpu_custom_call.1} parent=0 // loop_footer
    %s16 = sadd.s32 1, %s12
  $region7: #{tpu_custom_call.1} parent=0 // loop_footer_branch
    %11 = sbr.rel target = $region3
  $region8: #{tpu_custom_call.1} parent=0 // loop_exit
    _

</llo_original>
